<compile_context>
chip_gen: v7x
topology: tpu7x:2x2x1
jax: 0.10.0
libtpu: 0.0.40
codegen_flags: <defaults>
</compile_context>

<pallas_src>
import jax
import jax.numpy as jnp
from jax.experimental import pallas as pl
from jax.experimental.pallas import tpu as pltpu


TM_MAX = 256   # row-tile cap (frames tile at TK=4096 bf16 is 2 MiB -> fine)
TK_MAX = 4096  # bounds resident w_vid slab: 2 bufs * TK * Dv * 2 B


def _round_up(x, m):
    return ((x + m - 1) // m) * m


def _prefer_blockdiag_fusion():
    """Fuse the two K=128 projections only on 256-deep-MXU chips (v6e/v7x)."""
    try:
        kind = jax.devices()[0].device_kind.lower()
    except Exception:
        return True
    # v2-v5 generations have a 128-deep MXU contraction: K=128 is already full.
    return not any(tag in kind for tag in ("v2", "v3", "v4", "v5"))


# ----------------------------------------------------------------------------
# Pallas kernels
# ----------------------------------------------------------------------------
def _vidtext_kernel_blockdiag(frames_ref, txt_ref, wvid_ref, wvt_ref, bvt_ref,
                              out_ref, acc_ref):
    """v6e/v7x path: stub encoder (K-streamed) + both heads via one block-diag
    K=(Dv+Dt) matmul into a single lane-dense (TM, 2P) output slab."""
    k = pl.program_id(1)

    @pl.when(k == 0)
    def _():
        acc_ref[...] = jnp.zeros_like(acc_ref)

    # Stub video encoder: (TM, TK) @ (TK, Dv), f32 accumulation across K steps.
    acc_ref[...] += jnp.dot(frames_ref[...], wvid_ref[...],
                            preferred_element_type=jnp.float32)

    @pl.when(k == pl.num_programs(1) - 1)
    def _():
        vid_h = acc_ref[...].astype(jnp.bfloat16)            # (TM, Dv)
        t_act = jnp.maximum(txt_ref[...], 0)                 # bf16 ReLU (exact)
        cat = jnp.concatenate([vid_h, t_act], axis=-1)       # (TM, Dv+Dt)
        out = jnp.dot(cat, wvt_ref[...],                     # fills K=256 MXU
                      preferred_element_type=jnp.float32)    # (TM, 2P)
        out_ref[...] = (out + bvt_ref[...]).astype(out_ref.dtype)


def _vidtext_kernel_split(frames_ref, txt_ref, wvid_ref, wv_ref, bv_ref,
                          wt_ref, bt_ref, t_out_ref, v_out_ref, acc_ref):
    """v5e path: same structure, but the two K=128 projections stay separate
    (the 128-deep MXU is already full at K=128)."""
    k = pl.program_id(1)

    @pl.when(k == 0)
    def _():
        acc_ref[...] = jnp.zeros_like(acc_ref)

    acc_ref[...] += jnp.dot(frames_ref[...], wvid_ref[...],
                            preferred_element_type=jnp.float32)

    @pl.when(k == pl.num_programs(1) - 1)
    def _():
        v = jnp.dot(acc_ref[...].astype(jnp.bfloat16), wv_ref[...],
                    preferred_element_type=jnp.float32)
        v_out_ref[...] = (v + bv_ref[...]).astype(v_out_ref.dtype)
        t_act = jnp.maximum(txt_ref[...], 0)                 # bf16 ReLU
        t = jnp.dot(t_act, wt_ref[...], preferred_element_type=jnp.float32)
        t_out_ref[...] = (t + bt_ref[...]).astype(t_out_ref.dtype)


# ----------------------------------------------------------------------------
# Wrapper
# ----------------------------------------------------------------------------
def vidtext_project(frames_flat, text_feat, w_vid, wv, bv, wt, bt,
                    fuse_projections=None):
    """Fused VidText projection.

    Args:
      frames_flat: (B, Dframes) bf16 -- flattened frames (stub encoder input)
      text_feat  : (B, Dt)      bf16 -- CLS token of the text encoder
      w_vid      : (Dframes, Dv) bf16 -- stub video encoder projection
      wv         : (Dv, P) bf16, bv: (1, P) f32   -- v_to_joint
      wt         : (Dt, P) bf16, bt: (1, P) f32   -- t_to_joint Linear
    Returns:
      (t_feats, v_feats) each (B, P) float32 (same order as PyTorch forward).
    """
    B, Dframes = frames_flat.shape
    Dt = text_feat.shape[1]
    Dv = w_vid.shape[1]
    P = wv.shape[1]

    if fuse_projections is None:
        fuse_projections = _prefer_blockdiag_fusion()
    # Lane-clean in-kernel concat needs 128-aligned feature dims.
    fuse_projections = fuse_projections and Dv % 128 == 0 and Dt % 128 == 0

    # Row tile: biggest possible, but keep >= 2 grid steps when the batch
    # allows so both v7x TensorCores get work (at tiny batches the even split
    # dominates; at large batches TM saturates at TM_MAX).
    B16 = _round_up(B, 16)                       # bf16 sublane tile is (16,128)
    TM = min(TM_MAX, max(16, _round_up(pl.cdiv(B16, 2), 16)))
    B_pad = _round_up(B, TM)

    # K tile over Dframes (single step at demo sizes; caps resident w_vid for
    # production-sized fused encoders on v7x's 64 MiB VMEM).
    TK = _round_up(Dframes, 128) if Dframes <= TK_MAX else TK_MAX
    Df_pad = _round_up(Dframes, TK)

    if B_pad != B or Df_pad != Dframes:
        frames_flat = jnp.pad(frames_flat, ((0, B_pad - B), (0, Df_pad - Dframes)))
    if B_pad != B:
        text_feat = jnp.pad(text_feat, ((0, B_pad - B), (0, 0)))
    if Df_pad != Dframes:
        w_vid = jnp.pad(w_vid, ((0, Df_pad - Dframes), (0, 0)))

    grid = (B_pad // TM, Df_pad // TK)

    # Streamed / K-streamed operands (auto double-buffered by the pipeliner).
    frames_spec = pl.BlockSpec((TM, TK), lambda i, k: (i, k))
    txt_spec = pl.BlockSpec((TM, Dt), lambda i, k: (i, 0))
    wvid_spec = pl.BlockSpec((TK, Dv), lambda i, k: (k, 0))

    scratch = [pltpu.VMEM((TM, Dv), jnp.float32)]   # f32 vid-feature accumulator

    flops = 2 * B_pad * Df_pad * Dv + 2 * B_pad * (Dv + Dt) * P

    if fuse_projections:
        # Block-diagonal [wv 0; 0 wt]: one K=(Dv+Dt) push, one (TM, 2P) store.
        wvt = jnp.zeros((Dv + Dt, 2 * P), jnp.bfloat16)
        wvt = wvt.at[:Dv, :P].set(wv)
        wvt = wvt.at[Dv:, P:].set(wt)
        bvt = jnp.concatenate([bv, bt], axis=1).astype(jnp.float32)   # (1, 2P)

        in_specs = [frames_spec, txt_spec, wvid_spec,
                    pl.BlockSpec((Dv + Dt, 2 * P), lambda i, k: (0, 0)),
                    pl.BlockSpec((1, 2 * P), lambda i, k: (0, 0))]
        out_shape = jax.ShapeDtypeStruct((B_pad, 2 * P), jnp.float32)
        out_specs = pl.BlockSpec((TM, 2 * P), lambda i, k: (i, 0))
        kernel = _vidtext_kernel_blockdiag
        args = (frames_flat, text_feat, w_vid, wvt, bvt)
        weight_bytes = (Dv + Dt) * 2 * P * 2 + 2 * P * 4
        vmem_out = 2 * TM * 2 * P * 4
    else:
        in_specs = [frames_spec, txt_spec, wvid_spec,
                    pl.BlockSpec((Dv, P), lambda i, k: (0, 0)),
                    pl.BlockSpec((1, P), lambda i, k: (0, 0)),
                    pl.BlockSpec((Dt, P), lambda i, k: (0, 0)),
                    pl.BlockSpec((1, P), lambda i, k: (0, 0))]
        out_shape = (jax.ShapeDtypeStruct((B_pad, P), jnp.float32),
                     jax.ShapeDtypeStruct((B_pad, P), jnp.float32))
        out_specs = (pl.BlockSpec((TM, P), lambda i, k: (i, 0)),
                     pl.BlockSpec((TM, P), lambda i, k: (i, 0)))
        kernel = _vidtext_kernel_split
        args = (frames_flat, text_feat, w_vid, wv, bv, wt, bt)
        weight_bytes = Dv * P * 2 + Dt * P * 2 + 2 * P * 4
        vmem_out = 2 * 2 * TM * P * 4

    # Actual VMEM footprint (double-buffered tiles + resident weights + outputs
    # + accumulator) plus headroom — not the blanket 32 MiB scoped default.
    vmem_bytes = (2 * TM * TK * 2 + 2 * TM * Dt * 2 + 2 * TK * Dv * 2
                  + 2 * weight_bytes + vmem_out + TM * Dv * 4)
    vmem_limit = int(_round_up(vmem_bytes + 8 * 1024 * 1024, 1024 * 1024))

    bytes_accessed = int(B_pad * Df_pad * 2 + B_pad * Dt * 2 + Df_pad * Dv * 2
                         + weight_bytes + 2 * B_pad * P * 4)

    out = pl.pallas_call(
        kernel,
        out_shape=out_shape,
        grid_spec=pltpu.PrefetchScalarGridSpec(
            num_scalar_prefetch=0,
            grid=grid,
            in_specs=in_specs,
            out_specs=out_specs,
            scratch_shapes=scratch),
        compiler_params=pltpu.CompilerParams(
            dimension_semantics=("parallel", "arbitrary"),
            vmem_limit_bytes=vmem_limit),
        cost_estimate=pl.CostEstimate(
            flops=flops, transcendentals=0, bytes_accessed=bytes_accessed),
    )(*args)

    if fuse_projections:
        v_out = out[:B, :P]
        t_out = out[:B, P:]
    else:
        t_out, v_out = out[0][:B], out[1][:B]
    return t_out, v_out


# ----------------------------------------------------------------------------
# Deterministic stand-in encoders (glue)
# ----------------------------------------------------------------------------
# TODO(synk): the real video_encoder / text_encoder are arbitrary external
# modules (e.g. a ViT and a BERT); they are emulated here — the video encoder's
# projection matmul is fused into the Pallas kernel, the text encoder is an
# embedding lookup + CLS-token select kept in plain JAX.
def stub_text_encoder(input_ids, embed_table):
    last_hidden_state = embed_table[input_ids]            # (B, S, Dt)
    return last_hidden_state[:, 0, :]                     # (B, Dt) "CLS" token


# ----------------------------------------------------------------------------
# Full VidText forward
# ----------------------------------------------------------------------------
def vidtext_forward(frames, input_ids, params):
    B = frames.shape[0]
    frames_flat = frames.reshape(B, -1).astype(jnp.bfloat16)
    text_feat = stub_text_encoder(input_ids, params["embed_table"]).astype(jnp.bfloat16)
    # Outputs kept f32 (faithful to the PyTorch Linears); switch to bf16 if the
    # downstream contrastive loss accepts it to halve output writeback bytes.
    t_feats, v_feats = vidtext_project(
        frames_flat, text_feat,
        params["w_vid"], params["wv"], params["bv"],
        params["wt"], params["bt"])
    return t_feats, v_feats


if __name__ == "__main__":
    # Small, deterministic problem sizes.
    B = 24                       # batch (padded to a TM multiple inside)
    C, T, H, W = 3, 4, 16, 16    # frames (NCTHW) -> Dframes = 3072
    S = 8                        # text sequence length
    VOCAB = 100
    DV = 128                     # video_encoder.embed_dim
    DT = 128                     # text_encoder.config.hidden_size
    P = 256                      # projection_dim (module default)

    key = jax.random.PRNGKey(0)
    ks = jax.random.split(key, 8)

    frames = jax.random.normal(ks[0], (B, C, T, H, W), dtype=jnp.float32)
    input_ids = jax.random.randint(ks[1], (B, S), 0, VOCAB, dtype=jnp.int32)

    # Stand-in encoder parameters; weights stored bf16 in HBM.
    w_vid = (jax.random.normal(ks[2], (C * T * H * W, DV), jnp.float32)
             * 0.02).astype(jnp.bfloat16)
    embed_table = jax.random.normal(ks[3], (VOCAB, DT), jnp.float32) * 0.02

    # VidText parameters, pre-transposed (in, out) for x @ W; bf16 W, f32 bias.
    wv = (jax.random.normal(ks[4], (DV, P), jnp.float32)
          * (1.0 / (DV ** 0.5))).astype(jnp.bfloat16)
    bv = jax.random.normal(ks[5], (1, P), jnp.float32) * 0.01
    wt = (jax.random.normal(ks[6], (DT, P), jnp.float32)
          * (1.0 / (DT ** 0.5))).astype(jnp.bfloat16)
    bt = jax.random.normal(ks[7], (1, P), jnp.float32) * 0.01

    params = dict(w_vid=w_vid, embed_table=embed_table,
                  wv=wv, bv=bv, wt=wt, bt=bt)

    fwd = jax.jit(vidtext_forward)
    t_feats, v_feats = fwd(frames, input_ids, params)
    jax.block_until_ready((t_feats, v_feats))

    # Plain-JAX reference mirroring the kernel's bf16/f32 numerics.
    # NOTE: vid_hidden is downcast to bf16 between the two video matmuls (a
    # PyTorch f32-chained encoder would keep f32; precision loss accepted).
    frames_flat = frames.reshape(B, -1).astype(jnp.bfloat16)
    text_feat = stub_text_encoder(input_ids, embed_table).astype(jnp.bfloat16)
    vid_hidden_ref = jnp.dot(frames_flat, w_vid, preferred_element_type=jnp.float32)
    v_ref = jnp.dot(vid_hidden_ref.astype(jnp.bfloat16), wv,
                    preferred_element_type=jnp.float32) + bv
    t_act_ref = jnp.maximum(text_feat, 0)
    t_ref = jnp.dot(t_act_ref, wt, preferred_element_type=jnp.float32) + bt

    assert t_feats.shape == (B, P) and v_feats.shape == (B, P)
    assert jnp.allclose(v_feats, v_ref, atol=1e-2, rtol=1e-2)
    assert jnp.allclose(t_feats, t_ref, atol=1e-2, rtol=1e-2)

    print("KERNEL_OK")
</pallas_src>

<mosaic_0001>
module attributes {stable_mosaic.version = 11 : i64} {
  func.func @_vidtext_kernel_blockdiag(%arg0: i32, %arg1: i32, %arg2: memref<16x3072xbf16, #tpu.memory_space<vmem>>, %arg3: memref<16x128xbf16, #tpu.memory_space<vmem>>, %arg4: memref<3072x128xbf16, #tpu.memory_space<vmem>>, %arg5: memref<256x512xbf16, #tpu.memory_space<vmem>>, %arg6: memref<1x512xf32, #tpu.memory_space<vmem>>, %arg7: memref<16x512xf32, #tpu.memory_space<vmem>>, %arg8: memref<16x128xf32, #tpu.memory_space<vmem>>) attributes {dimension_semantics = [#tpu.dimension_semantics<parallel>, #tpu.dimension_semantics<arbitrary>], iteration_bounds = array<i64: 2, 1>, scalar_prefetch = 0 : i64, scratch_operands = 1 : i64, tpu.core_type = #tpu.core_type<tc>, window_params = [{transform_indices = @transform_0, window_bounds = array<i64: 16, 3072>}, {transform_indices = @transform_1, window_bounds = array<i64: 16, 128>}, {transform_indices = @transform_2, window_bounds = array<i64: 3072, 128>}, {pipeline_mode = #tpu.pipeline_mode<synchronous>, transform_indices = @transform_3, window_bounds = array<i64: 256, 512>}, {pipeline_mode = #tpu.pipeline_mode<synchronous>, transform_indices = @transform_4, window_bounds = array<i64: 1, 512>}, {transform_indices = @transform_5, window_bounds = array<i64: 16, 512>}]} {
    %c0_i32 = arith.constant 0 : i32
    %0 = arith.cmpi eq, %arg1, %c0_i32 : i32
    %1 = arith.extui %0 : i1 to i32
    %c0_i32_0 = arith.constant 0 : i32
    %2 = arith.cmpi ne, %1, %c0_i32_0 : i32
    scf.if %2 {
      %cst_10 = arith.constant 0.000000e+00 : f32
      %12 = vector.broadcast %cst_10 : f32 to vector<16x128xf32>
      %c0_11 = arith.constant 0 : index
      %c0_12 = arith.constant 0 : index
      %13 = vector.load %arg8[%c0_11, %c0_12] : memref<16x128xf32, #tpu.memory_space<vmem>>, vector<16x128xf32>
      tpu.vector_store %arg8[%c0_11, %c0_12], %12 {strides = array<i32>} : memref<16x128xf32, #tpu.memory_space<vmem>>, vector<16x128xf32>,
    } else {
    }
    %c0 = arith.constant 0 : index
    %c0_1 = arith.constant 0 : index
    %3 = vector.load %arg8[%c0, %c0_1] : memref<16x128xf32, #tpu.memory_space<vmem>>, vector<16x128xf32>
    %c0_2 = arith.constant 0 : index
    %c0_3 = arith.constant 0 : index
    %4 = vector.load %arg2[%c0_2, %c0_3] : memref<16x3072xbf16, #tpu.memory_space<vmem>>, vector<16x3072xbf16>
    %c0_4 = arith.constant 0 : index
    %c0_5 = arith.constant 0 : index
    %5 = vector.load %arg4[%c0_4, %c0_5] : memref<3072x128xbf16, #tpu.memory_space<vmem>>, vector<3072x128xbf16>
    %cst = arith.constant dense<0.000000e+00> : vector<16x128xf32>
    %6 = tpu.matmul %4, %5, %cst {dimension_numbers = #tpu.dot_dimension_numbers<[1], [0], [0], [1], [0, 0, 1, 1], [], []>} : vector<16x3072xbf16>, vector<3072x128xbf16>, vector<16x128xf32> -> vector<16x128xf32>
    %7 = arith.addf %3, %6 : vector<16x128xf32>
    %c0_6 = arith.constant 0 : index
    %c0_7 = arith.constant 0 : index
    %8 = vector.load %arg8[%c0_6, %c0_7] : memref<16x128xf32, #tpu.memory_space<vmem>>, vector<16x128xf32>
    tpu.vector_store %arg8[%c0_6, %c0_7], %7 {strides = array<i32>} : memref<16x128xf32, #tpu.memory_space<vmem>>, vector<16x128xf32>,
    %c0_i32_8 = arith.constant 0 : i32
    %9 = arith.cmpi eq, %arg1, %c0_i32_8 : i32
    %10 = arith.extui %9 : i1 to i32
    %c0_i32_9 = arith.constant 0 : i32
    %11 = arith.cmpi ne, %10, %c0_i32_9 : i32
    scf.if %11 {
      %c0_10 = arith.constant 0 : index
      %c0_11 = arith.constant 0 : index
      %12 = vector.load %arg8[%c0_10, %c0_11] : memref<16x128xf32, #tpu.memory_space<vmem>>, vector<16x128xf32>
      %13 = arith.truncf %12 : vector<16x128xf32> to vector<16x128xbf16>
      %c0_12 = arith.constant 0 : index
      %c0_13 = arith.constant 0 : index
      %14 = vector.load %arg3[%c0_12, %c0_13] : memref<16x128xbf16, #tpu.memory_space<vmem>>, vector<16x128xbf16>
      %cst_14 = arith.constant 0.000000e+00 : bf16
      %15 = vector.broadcast %cst_14 : bf16 to vector<16x128xbf16>
      %16 = arith.maximumf %14, %15 : vector<16x128xbf16>
      %17 = tpu.concatenate %13, %16 in 1 : vector<16x128xbf16>, vector<16x128xbf16> -> vector<16x256xbf16>
      %c0_15 = arith.constant 0 : index
      %c0_16 = arith.constant 0 : index
      %18 = vector.load %arg5[%c0_15, %c0_16] : memref<256x512xbf16, #tpu.memory_space<vmem>>, vector<256x512xbf16>
      %cst_17 = arith.constant dense<0.000000e+00> : vector<16x512xf32>
      %19 = tpu.matmul %17, %18, %cst_17 {dimension_numbers = #tpu.dot_dimension_numbers<[1], [0], [0], [1], [0, 0, 1, 1], [], []>} : vector<16x256xbf16>, vector<256x512xbf16>, vector<16x512xf32> -> vector<16x512xf32>
      %c0_18 = arith.constant 0 : index
      %c0_19 = arith.constant 0 : index
      %20 = vector.load %arg6[%c0_18, %c0_19] : memref<1x512xf32, #tpu.memory_space<vmem>>, vector<1x512xf32>
      %21 = vector.broadcast %20 : vector<1x512xf32> to vector<16x512xf32>
      %22 = arith.addf %19, %21 : vector<16x512xf32>
      %c0_20 = arith.constant 0 : index
      %c0_21 = arith.constant 0 : index
      %23 = vector.load %arg7[%c0_20, %c0_21] : memref<16x512xf32, #tpu.memory_space<vmem>>, vector<16x512xf32>
      tpu.vector_store %arg7[%c0_20, %c0_21], %22 {strides = array<i32>} : memref<16x512xf32, #tpu.memory_space<vmem>>, vector<16x512xf32>,
    } else {
    }
    return
  }
  func.func @transform_0(%arg0: i32, %arg1: i32) -> (i32, i32) {
    %c0_i32 = arith.constant 0 : i32
    return %arg0, %arg1 : i32, i32
  }
  func.func @transform_1(%arg0: i32, %arg1: i32) -> (i32, i32) {
    %c0_i32 = arith.constant 0 : i32
    %c0_i32_0 = arith.constant 0 : i32
    return %arg0, %c0_i32 : i32, i32
  }
  func.func @transform_2(%arg0: i32, %arg1: i32) -> (i32, i32) {
    %c0_i32 = arith.constant 0 : i32
    %c0_i32_0 = arith.constant 0 : i32
    return %arg1, %c0_i32 : i32, i32
  }
  func.func @transform_3(%arg0: i32, %arg1: i32) -> (i32, i32) {
    %c0_i32 = arith.constant 0 : i32
    %c0_i32_0 = arith.constant 0 : i32
    %c0_i32_1 = arith.constant 0 : i32
    return %c0_i32, %c0_i32_0 : i32, i32
  }
  func.func @transform_4(%arg0: i32, %arg1: i32) -> (i32, i32) {
    %c0_i32 = arith.constant 0 : i32
    %c0_i32_0 = arith.constant 0 : i32
    %c0_i32_1 = arith.constant 0 : i32
    return %c0_i32, %c0_i32_0 : i32, i32
  }
  func.func @transform_5(%arg0: i32, %arg1: i32) -> (i32, i32) {
    %c0_i32 = arith.constant 0 : i32
    %c0_i32_0 = arith.constant 0 : i32
    return %arg0, %c0_i32 : i32, i32
  }
}

</mosaic_0001>

<llo_original>
// kernel: vidtext_forward.1
$region0: #{vidtext_forward.1}
  #allocation0 [shape = 'u32[]', space=smem, size = 0x4, offset = 0x4, fixed_abs, tag = 'smem constant byte address 0x4 - core index']
  #allocation1 [shape = 'u32[144,128]{1,0:T(1,128)}', space=vmem, size = 0x12000, scoped, tag = 'internal scratch']
  #allocation2 [shape = 'f32[16,128]{1,0:T(8,128)}', space=vmem, size = 0x2000, scoped, tag = 'scratch operand']
  %s0 = inlined_call_operand.vmem [shape: bf16[32,3072], index: 0, kind: input, shape index: {}]
  %s1 = inlined_call_operand.vmem [shape: bf16[32,128], index: 1, kind: input, shape index: {}]
  %s2 = inlined_call_operand.vmem [shape: bf16[3072,128], index: 2, kind: input, shape index: {}]
  %s3 = inlined_call_operand.vmem [shape: bf16[256,512], index: 3, kind: input, shape index: {}]
  %s4 = inlined_call_operand.vmem [shape: f32[1,512], index: 4, kind: input, shape index: {}]
  %s5 = inlined_call_operand.vmem [shape: f32[32,512], index: 5, kind: output, shape index: {}]
  %s6 = sld [smem:[#allocation0]]
  $region61: #{vidtext_forward.1} parent=0
    _
  %s8 = ssub.s32 1, %s6
  %s9 = scalar_select 0, %s8, %s6
  loop: start=0, step=1, limit=4
  $region2: #{vidtext_forward.1} parent=0 // loop_pre_header
    _
  $region3: #{vidtext_forward.1} parent=0 // loop_header
    %s11 = sphi 0, %s15
    %p12 = scmp.ge.s32.totalorder %s11, 4
    %s18 = sphi 0, %s30
    %s19 = sphi 0, %s26
    %s20 = sphi 0, %s18
    %s21 = sphi 0, %s19
    %s22 = sphi 0, %s20
    %s23 = sphi 0, %s21
    %s35 = sphi 0, %s37
    %s38 = sphi 0, %s35
    %s39 = sphi 0, %s38
    %s55 = sphi 0, %s39
    %s61 = sphi 0, %s63
    %s64 = sphi 0, %s61
    %s65 = sphi 0, %s64
    %s81 = sphi 0, %s65
    %s87 = sphi 0, %s89
    %s90 = sphi 0, %s87
    %s91 = sphi 0, %s90
    %s107 = sphi 0, %s91
    %s111 = sphi 0, %s111
    %s113 = sphi 0, %s111
    %s114 = sphi 0, %s113
    %s128 = sphi 0, %s114
    %s132 = sphi 0, %s132
    %s134 = sphi 0, %s132
    %s135 = sphi 0, %s134
    %s149 = sphi 0, %s135
    %s155 = sphi 0, %s157
    %s158 = sphi 0, %s155
    %s159 = sphi 0, %s158
    %s175 = sphi 0, %s159
  $region4: #{vidtext_forward.1} parent=0 // loop_header_branch
    %14 = sbr.rel (%p12) target = $region8
  $region5: #{vidtext_forward.1} parent=0 // loop_body
    %s16 = ssub.s32 %s11, 1
    %s17 = ssub.s32 %s11, 2
    %s24 = sadd.s32 1, %s19
    %p25 = scmp.ge.s32.totalorder %s24, 1
    %s26 = scalar_select %p25, 0, %s24
    %s27 = sadd.s32 1, %s18
    %s28 = scalar_select %p25, %s27, %s18
    %p29 = scmp.ge.s32.totalorder %s28, 2
    %s30 = scalar_select %p29, 0, %s28
    %s31 = ssub.s32 %s18, %s30
    %s32 = ssub.s32 %s19, %s26
    %s33 = sor.u32 %s31, %s32
    %p34 = scmp.eq.s32.totalorder %s33, 0
    %s36 = sadd.s32 %s35, 1
    %s37 = scalar_select %p34, %s35, %s36
    %p40 = pneg %p34
    %p41 = scmp.eq.s32.totalorder %s11, 1
    %p42 = por %p40, %p41
    %p43 = scmp.ne.s32.totalorder %s35, %s38
    %p44 = scmp.eq.s32.totalorder %s11, 0
    %p45 = por %p43, %p44
    %p46 = scmp.ne.s32.totalorder %s35, %s38
    %p47 = scmp.eq.s32.totalorder %s16, 1
    %p48 = por %p46, %p47
    %p49 = scmp.ne.s32.totalorder %s38, %s39
    %p50 = scmp.eq.s32.totalorder %s16, 0
    %p51 = por %p49, %p50
    %p52 = scmp.ne.s32.totalorder %s38, %s39
    %p53 = scmp.eq.s32.totalorder %s17, 1
    %p54 = por %p52, %p53
    %p56 = scmp.ne.s32.totalorder %s39, %s55
    %p57 = scmp.eq.s32.totalorder %s17, 0
    %p58 = por %p56, %p57
    %s59 = ssub.s32 %s18, %s30
    %p60 = scmp.eq.s32.totalorder %s59, 0
    %s62 = sadd.s32 %s61, 1
    %s63 = scalar_select %p60, %s61, %s62
    %p66 = pneg %p60
    %p67 = scmp.eq.s32.totalorder %s11, 1
    %p68 = por %p66, %p67
    %p69 = scmp.ne.s32.totalorder %s61, %s64
    %p70 = scmp.eq.s32.totalorder %s11, 0
    %p71 = por %p69, %p70
    %p72 = scmp.ne.s32.totalorder %s61, %s64
    %p73 = scmp.eq.s32.totalorder %s16, 1
    %p74 = por %p72, %p73
    %p75 = scmp.ne.s32.totalorder %s64, %s65
    %p76 = scmp.eq.s32.totalorder %s16, 0
    %p77 = por %p75, %p76
    %p78 = scmp.ne.s32.totalorder %s64, %s65
    %p79 = scmp.eq.s32.totalorder %s17, 1
    %p80 = por %p78, %p79
    %p82 = scmp.ne.s32.totalorder %s65, %s81
    %p83 = scmp.eq.s32.totalorder %s17, 0
    %p84 = por %p82, %p83
    %s85 = ssub.s32 %s19, %s26
    %p86 = scmp.eq.s32.totalorder %s85, 0
    %s88 = sadd.s32 %s87, 1
    %s89 = scalar_select %p86, %s87, %s88
    %p92 = pneg %p86
    %p93 = scmp.eq.s32.totalorder %s11, 1
    %p94 = por %p92, %p93
    %p95 = scmp.ne.s32.totalorder %s87, %s90
    %p96 = scmp.eq.s32.totalorder %s11, 0
    %p97 = por %p95, %p96
    %p98 = scmp.ne.s32.totalorder %s87, %s90
    %p99 = scmp.eq.s32.totalorder %s16, 1
    %p100 = por %p98, %p99
    %p101 = scmp.ne.s32.totalorder %s90, %s91
    %p102 = scmp.eq.s32.totalorder %s16, 0
    %p103 = por %p101, %p102
    %p104 = scmp.ne.s32.totalorder %s90, %s91
    %p105 = scmp.eq.s32.totalorder %s17, 1
    %p106 = por %p104, %p105
    %p108 = scmp.ne.s32.totalorder %s91, %s107
    %p109 = scmp.eq.s32.totalorder %s17, 0
    %p110 = por %p108, %p109
    %s112 = sadd.s32 %s111, 1
    %p115 = scmp.eq.s32.totalorder %s11, 1
    %p116 = scmp.ne.s32.totalorder %s111, %s113
    %p117 = scmp.eq.s32.totalorder %s11, 0
    %p118 = por %p116, %p117
    %p119 = scmp.ne.s32.totalorder %s111, %s113
    %p120 = scmp.eq.s32.totalorder %s16, 1
    %p121 = por %p119, %p120
    %p122 = scmp.ne.s32.totalorder %s113, %s114
    %p123 = scmp.eq.s32.totalorder %s16, 0
    %p124 = por %p122, %p123
    %p125 = scmp.ne.s32.totalorder %s113, %s114
    %p126 = scmp.eq.s32.totalorder %s17, 1
    %p127 = por %p125, %p126
    %p129 = scmp.ne.s32.totalorder %s114, %s128
    %p130 = scmp.eq.s32.totalorder %s17, 0
    %p131 = por %p129, %p130
    %s133 = sadd.s32 %s132, 1
    %p136 = scmp.eq.s32.totalorder %s11, 1
    %p137 = scmp.ne.s32.totalorder %s132, %s134
    %p138 = scmp.eq.s32.totalorder %s11, 0
    %p139 = por %p137, %p138
    %p140 = scmp.ne.s32.totalorder %s132, %s134
    %p141 = scmp.eq.s32.totalorder %s16, 1
    %p142 = por %p140, %p141
    %p143 = scmp.ne.s32.totalorder %s134, %s135
    %p144 = scmp.eq.s32.totalorder %s16, 0
    %p145 = por %p143, %p144
    %p146 = scmp.ne.s32.totalorder %s134, %s135
    %p147 = scmp.eq.s32.totalorder %s17, 1
    %p148 = por %p146, %p147
    %p150 = scmp.ne.s32.totalorder %s135, %s149
    %p151 = scmp.eq.s32.totalorder %s17, 0
    %p152 = por %p150, %p151
    %s153 = ssub.s32 %s18, %s30
    %p154 = scmp.eq.s32.totalorder %s153, 0
    %s156 = sadd.s32 %s155, 1
    %s157 = scalar_select %p154, %s155, %s156
    %p160 = pneg %p154
    %p161 = scmp.eq.s32.totalorder %s11, 1
    %p162 = por %p160, %p161
    %p163 = scmp.ne.s32.totalorder %s155, %s158
    %p164 = scmp.eq.s32.totalorder %s11, 0
    %p165 = por %p163, %p164
    %p166 = scmp.ne.s32.totalorder %s155, %s158
    %p167 = scmp.eq.s32.totalorder %s16, 1
    %p168 = por %p166, %p167
    %p169 = scmp.ne.s32.totalorder %s158, %s159
    %p170 = scmp.eq.s32.totalorder %s16, 0
    %p171 = por %p169, %p170
    %p172 = scmp.ne.s32.totalorder %s158, %s159
    %p173 = scmp.eq.s32.totalorder %s17, 1
    %p174 = por %p172, %p173
    %p176 = scmp.ne.s32.totalorder %s159, %s175
    %p177 = scmp.eq.s32.totalorder %s17, 0
    %p178 = por %p176, %p177
    %p179 = scmp.le.s32.totalorder 1, %s11
    %p180 = scmp.lt.s32.totalorder %s11, 3
    %p181 = pnand %p179, %p180
    %p182 = pneg %p181
    // Predicated region
    $region9: #{vidtext_forward.1} parent=5 // pred_check
      _
    $region10: #{vidtext_forward.1} parent=5 // pred_check_branch
      %184 = sbr.rel (%p181) target = $region12
    $region11: #{vidtext_forward.1} parent=5 // pred_region
      %s185 = ssub.s32 %s11, 1
      // Predicated region
      $region13: #{vidtext_forward.1} parent=11 // pred_check
        %p186 = pneg %p103
      $region14: #{vidtext_forward.1} parent=11 // pred_check_branch
        %188 = sbr.rel (%p186) target = $region16
      $region15: #{vidtext_forward.1} parent=11 // pred_region
        %s189 = smul.u32 384, %s21
        %p190 = scmp.lt.s32.totalorder %s189, 383
        %s191 = scalar_select %p190, %s189, 383
        %s192 = smul.addr %s191, 4
        %s193 = scalar_lea.vmem %s2, %s192
        %s194 = smul.u32 384, %s21
      $region16: #{vidtext_forward.1} parent=11 // pred_fallthru
        _
      // Predicated region
      $region17: #{vidtext_forward.1} parent=11 // pred_check
        %p195 = pneg %p124
      $region18: #{vidtext_forward.1} parent=11 // pred_check_branch
        %197 = sbr.rel (%p195) target = $region20
      $region19: #{vidtext_forward.1} parent=11 // pred_region
        _
      $region20: #{vidtext_forward.1} parent=11 // pred_fallthru
        _
      // Predicated region
      $region21: #{vidtext_forward.1} parent=11 // pred_check
        %p198 = pneg %p145
      $region22: #{vidtext_forward.1} parent=11 // pred_check_branch
        %200 = sbr.rel (%p198) target = $region24
      $region23: #{vidtext_forward.1} parent=11 // pred_region
        _
      $region24: #{vidtext_forward.1} parent=11 // pred_fallthru
        _
    $region12: #{vidtext_forward.1} parent=5 // pred_fallthru
      _
    %p201 = scmp.lt.s32.totalorder %s11, 2
    // Predicated region
    $region25: #{vidtext_forward.1} parent=5 // pred_check
      %p202 = pneg %p201
    $region26: #{vidtext_forward.1} parent=5 // pred_check_branch
      %204 = sbr.rel (%p202) target = $region28
    $region27: #{vidtext_forward.1} parent=5 // pred_region
      // Predicated region
      $region29: #{vidtext_forward.1} parent=27 // pred_check
        %p205 = pneg %p45
      $region30: #{vidtext_forward.1} parent=27 // pred_check_branch
        %207 = sbr.rel (%p205) target = $region32
      $region31: #{vidtext_forward.1} parent=27 // pred_region
        %s208 = smul.u32 2, %s18
        %s209 = smul.u32 24, %s19
        %p210 = scmp.lt.s32.totalorder %s208, 3
        %s211 = scalar_select %p210, %s208, 3
        %p212 = scmp.lt.s32.totalorder %s209, 23
        %s213 = scalar_select %p212, %s209, 23
        %s214 = smul.addr %s211, 24
        %s215 = sadd.s32 %s213, %s214
        %s216 = smul.addr %s215, 4
        %s217 = scalar_lea.vmem %s0, %s216
        %s218 = smul.u32 2, %s18
        %s219 = smul.u32 24, %s19
      $region32: #{vidtext_forward.1} parent=27 // pred_fallthru
        _
      // Predicated region
      $region33: #{vidtext_forward.1} parent=27 // pred_check
        %p220 = pneg %p71
      $region34: #{vidtext_forward.1} parent=27 // pred_check_branch
        %222 = sbr.rel (%p220) target = $region36
      $region35: #{vidtext_forward.1} parent=27 // pred_region
        %s223 = smul.u32 2, %s18
        %p224 = scmp.lt.s32.totalorder %s223, 3
        %s225 = scalar_select %p224, %s223, 3
        %s226 = smul.addr %s225, 4
        %s227 = scalar_lea.vmem %s1, %s226
        %s228 = smul.u32 2, %s18
      $region36: #{vidtext_forward.1} parent=27 // pred_fallthru
        _
    $region28: #{vidtext_forward.1} parent=5 // pred_fallthru
      _
    %p229 = scmp.le.s32.totalorder 1, %s11
    %p230 = scmp.lt.s32.totalorder %s11, 3
    %p231 = pnand %p229, %p230
    %p232 = pneg %p231
    // Predicated region
    $region37: #{vidtext_forward.1} parent=5 // pred_check
      _
    $region38: #{vidtext_forward.1} parent=5 // pred_check_branch
      %234 = sbr.rel (%p231) target = $region40
    $region39: #{vidtext_forward.1} parent=5 // pred_region
      %s235 = ssub.s32 %s11, 1
      %s236 = smul.u32 2, %s20
      %s237 = smul.u32 24, %s21
      %p238 = scmp.lt.s32.totalorder %s236, 3
      %s239 = scalar_select %p238, %s236, 3
      %p240 = scmp.lt.s32.totalorder %s237, 23
      %s241 = scalar_select %p240, %s237, 23
      %s242 = smul.addr %s239, 24
      %s243 = sadd.s32 %s241, %s242
      %s244 = smul.addr %s243, 4
      %s245 = scalar_lea.vmem %s0, %s244
      %p246 = pneg %p51
      %p247 = pneg %p48
      %s248 = smul.u32 2, %s20
      %p249 = scmp.lt.s32.totalorder %s248, 3
      %s250 = scalar_select %p249, %s248, 3
      %s251 = smul.addr %s250, 4
      %s252 = scalar_lea.vmem %s1, %s251
      %p253 = pneg %p77
      %p254 = pneg %p74
      %s255 = smul.u32 384, %s21
      %p256 = scmp.lt.s32.totalorder %s255, 383
      %s257 = scalar_select %p256, %s255, 383
      %s258 = smul.addr %s257, 4
      %s259 = scalar_lea.vmem %s2, %s258
      %p260 = pneg %p103
      %p261 = pneg %p100
      %p262 = pneg %p124
      %p263 = pneg %p121
      %p264 = pneg %p145
      %p265 = pneg %p142
      %p266 = pneg %p171
      %p267 = pneg %p168
      %s268 = smul.u32 2, %s20
      %p269 = scmp.lt.s32.totalorder %s268, 3
      %s270 = scalar_select %p269, %s268, 3
      %s271 = smul.addr %s270, 4
      %s272 = smul.addr %s271, 8
      %s273 = scalar_lea.vmem %s5, %s272
      %s274 = smul.u32 2, %s20
      %s275 = smul.u32 24, %s21
      %p276 = scmp.lt.s32.totalorder %s274, 3
      %s277 = scalar_select %p276, %s274, 3
      %p278 = scmp.lt.s32.totalorder %s275, 23
      %s279 = scalar_select %p278, %s275, 23
      %s280 = smul.addr %s277, 24
      %s281 = sadd.s32 %s279, %s280
      %s282 = smul.addr %s281, 4
      %s283 = scalar_lea.vmem %s0, %s282
      %s284 = smul.u32 2, %s20
      %s285 = smul.u32 24, %s21
      %s286 = smul.u32 2, %s20
      %p287 = scmp.lt.s32.totalorder %s286, 3
      %s288 = scalar_select %p287, %s286, 3
      %s289 = smul.addr %s288, 4
      %s290 = scalar_lea.vmem %s1, %s289
      %s291 = smul.u32 2, %s20
      %s292 = smul.u32 384, %s21
      %p293 = scmp.lt.s32.totalorder %s292, 383
      %s294 = scalar_select %p293, %s292, 383
      %s295 = smul.addr %s294, 4
      %s296 = scalar_lea.vmem %s2, %s295
      %s297 = smul.u32 384, %s21
      %s298 = smul.u32 2, %s20
      %p299 = scmp.lt.s32.totalorder %s298, 3
      %s300 = scalar_select %p299, %s298, 3
      %s301 = smul.addr %s300, 4
      %s302 = smul.addr %s301, 8
      %s303 = scalar_lea.vmem %s5, %s302
      %s304 = smul.u32 2, %s20
      %p306 = scmp.eq.s32.totalorder %s21, 0
      // Predicated region
      $region41: #{vidtext_forward.1} parent=39 // pred_check
        %p307 = pneg %p306
      $region42: #{vidtext_forward.1} parent=39 // pred_check_branch
        %309 = sbr.rel (%p307) target = $region44
      $region43: #{vidtext_forward.1} parent=39 // pred_region
        %310 = vst [vmem:[#allocation2] sm:$0xff] 0.0
        %311 = vst [vmem:[#allocation2 + $0x8] sm:$0xff] 0.0
      $region44: #{vidtext_forward.1} parent=39 // pred_fallthru
        _
      %v312 = vld [vmem:[#allocation2] sm:$0xff]
      %v313 = vld [vmem:[#allocation2 + $0x8] sm:$0xff]
      %v314 = vld [vmem:[%s283] sm:$0xff]
      %v315 = vld [vmem:[%s283 + $0x8] sm:$0xff]
      %v316 = vld [vmem:[%s283 + $0x10] sm:$0xff]
      %v317 = vld [vmem:[%s283 + $0x18] sm:$0xff]
      %v318 = vld [vmem:[%s283 + $0x20] sm:$0xff]
      %v319 = vld [vmem:[%s283 + $0x28] sm:$0xff]
      %v320 = vld [vmem:[%s283 + $0x30] sm:$0xff]
      %v321 = vld [vmem:[%s283 + $0x38] sm:$0xff]
      %v322 = vld [vmem:[%s283 + $0x40] sm:$0xff]
      %v323 = vld [vmem:[%s283 + $0x48] sm:$0xff]
      %v324 = vld [vmem:[%s283 + $0x50] sm:$0xff]
      %v325 = vld [vmem:[%s283 + $0x58] sm:$0xff]
      %v326 = vld [vmem:[%s283 + $0x60] sm:$0xff]
      %v327 = vld [vmem:[%s283 + $0x68] sm:$0xff]
      %v328 = vld [vmem:[%s283 + $0x70] sm:$0xff]
      %v329 = vld [vmem:[%s283 + $0x78] sm:$0xff]
      %v330 = vld [vmem:[%s283 + $0x80] sm:$0xff]
      %v331 = vld [vmem:[%s283 + $0x88] sm:$0xff]
      %v332 = vld [vmem:[%s283 + $0x90] sm:$0xff]
      %v333 = vld [vmem:[%s283 + $0x98] sm:$0xff]
      %v334 = vld [vmem:[%s283 + $0xa0] sm:$0xff]
      %v335 = vld [vmem:[%s283 + $0xa8] sm:$0xff]
      %v336 = vld [vmem:[%s283 + $0xb0] sm:$0xff]
      %v337 = vld [vmem:[%s283 + $0xb8] sm:$0xff]
      %v338 = vld [vmem:[%s296] sm:$0xf]
      %v339 = vld [vmem:[%s296 + $0x4] sm:$0xf]
      %v340 = vld [vmem:[%s296 + $0x8] sm:$0xf]
      %v341 = vld [vmem:[%s296 + $0xc] sm:$0xf]
      %v342 = vld [vmem:[%s296 + $0x10] sm:$0xf]
      %v343 = vld [vmem:[%s296 + $0x14] sm:$0xf]
      %v344 = vld [vmem:[%s296 + $0x18] sm:$0xf]
      %v345 = vld [vmem:[%s296 + $0x1c] sm:$0xf]
      %v346 = vld [vmem:[%s296 + $0x20] sm:$0xf]
      %v347 = vld [vmem:[%s296 + $0x24] sm:$0xf]
      %v348 = vld [vmem:[%s296 + $0x28] sm:$0xf]
      %v349 = vld [vmem:[%s296 + $0x2c] sm:$0xf]
      %v350 = vld [vmem:[%s296 + $0x30] sm:$0xf]
      %v351 = vld [vmem:[%s296 + $0x34] sm:$0xf]
      %v352 = vld [vmem:[%s296 + $0x38] sm:$0xf]
      %v353 = vld [vmem:[%s296 + $0x3c] sm:$0xf]
      %v354 = vld [vmem:[%s296 + $0x40] sm:$0xf]
      %v355 = vld [vmem:[%s296 + $0x44] sm:$0xf]
      %v356 = vld [vmem:[%s296 + $0x48] sm:$0xf]
      %v357 = vld [vmem:[%s296 + $0x4c] sm:$0xf]
      %v358 = vld [vmem:[%s296 + $0x50] sm:$0xf]
      %v359 = vld [vmem:[%s296 + $0x54] sm:$0xf]
      %v360 = vld [vmem:[%s296 + $0x58] sm:$0xf]
      %v361 = vld [vmem:[%s296 + $0x5c] sm:$0xf]
      %v362 = vld [vmem:[%s296 + $0x60] sm:$0xf]
      %v363 = vld [vmem:[%s296 + $0x64] sm:$0xf]
      %v364 = vld [vmem:[%s296 + $0x68] sm:$0xf]
      %v365 = vld [vmem:[%s296 + $0x6c] sm:$0xf]
      %v366 = vld [vmem:[%s296 + $0x70] sm:$0xf]
      %v367 = vld [vmem:[%s296 + $0x74] sm:$0xf]
      %v368 = vld [vmem:[%s296 + $0x78] sm:$0xf]
      %v369 = vld [vmem:[%s296 + $0x7c] sm:$0xf]
      %v370 = vld [vmem:[%s296 + $0x80] sm:$0xf]
      %v371 = vld [vmem:[%s296 + $0x84] sm:$0xf]
      %v372 = vld [vmem:[%s296 + $0x88] sm:$0xf]
      %v373 = vld [vmem:[%s296 + $0x8c] sm:$0xf]
      %v374 = vld [vmem:[%s296 + $0x90] sm:$0xf]
      %v375 = vld [vmem:[%s296 + $0x94] sm:$0xf]
      %v376 = vld [vmem:[%s296 + $0x98] sm:$0xf]
      %v377 = vld [vmem:[%s296 + $0x9c] sm:$0xf]
      %v378 = vld [vmem:[%s296 + $0xa0] sm:$0xf]
      %v379 = vld [vmem:[%s296 + $0xa4] sm:$0xf]
      %v380 = vld [vmem:[%s296 + $0xa8] sm:$0xf]
      %v381 = vld [vmem:[%s296 + $0xac] sm:$0xf]
      %v382 = vld [vmem:[%s296 + $0xb0] sm:$0xf]
      %v383 = vld [vmem:[%s296 + $0xb4] sm:$0xf]
      %v384 = vld [vmem:[%s296 + $0xb8] sm:$0xf]
      %v385 = vld [vmem:[%s296 + $0xbc] sm:$0xf]
      %v386 = vld [vmem:[%s296 + $0xc0] sm:$0xf]
      %v387 = vld [vmem:[%s296 + $0xc4] sm:$0xf]
      %v388 = vld [vmem:[%s296 + $0xc8] sm:$0xf]
      %v389 = vld [vmem:[%s296 + $0xcc] sm:$0xf]
      %v390 = vld [vmem:[%s296 + $0xd0] sm:$0xf]
      %v391 = vld [vmem:[%s296 + $0xd4] sm:$0xf]
      %v392 = vld [vmem:[%s296 + $0xd8] sm:$0xf]
      %v393 = vld [vmem:[%s296 + $0xdc] sm:$0xf]
      %v394 = vld [vmem:[%s296 + $0xe0] sm:$0xf]
      %v395 = vld [vmem:[%s296 + $0xe4] sm:$0xf]
      %v396 = vld [vmem:[%s296 + $0xe8] sm:$0xf]
      %v397 = vld [vmem:[%s296 + $0xec] sm:$0xf]
      %v398 = vld [vmem:[%s296 + $0xf0] sm:$0xf]
      %v399 = vld [vmem:[%s296 + $0xf4] sm:$0xf]
      %v400 = vld [vmem:[%s296 + $0xf8] sm:$0xf]
      %v401 = vld [vmem:[%s296 + $0xfc] sm:$0xf]
      %v402 = vld [vmem:[%s296 + $0x100] sm:$0xf]
      %v403 = vld [vmem:[%s296 + $0x104] sm:$0xf]
      %v404 = vld [vmem:[%s296 + $0x108] sm:$0xf]
      %v405 = vld [vmem:[%s296 + $0x10c] sm:$0xf]
      %v406 = vld [vmem:[%s296 + $0x110] sm:$0xf]
      %v407 = vld [vmem:[%s296 + $0x114] sm:$0xf]
      %v408 = vld [vmem:[%s296 + $0x118] sm:$0xf]
      %v409 = vld [vmem:[%s296 + $0x11c] sm:$0xf]
      %v410 = vld [vmem:[%s296 + $0x120] sm:$0xf]
      %v411 = vld [vmem:[%s296 + $0x124] sm:$0xf]
      %v412 = vld [vmem:[%s296 + $0x128] sm:$0xf]
      %v413 = vld [vmem:[%s296 + $0x12c] sm:$0xf]
      %v414 = vld [vmem:[%s296 + $0x130] sm:$0xf]
      %v415 = vld [vmem:[%s296 + $0x134] sm:$0xf]
      %v416 = vld [vmem:[%s296 + $0x138] sm:$0xf]
      %v417 = vld [vmem:[%s296 + $0x13c] sm:$0xf]
      %v418 = vld [vmem:[%s296 + $0x140] sm:$0xf]
      %v419 = vld [vmem:[%s296 + $0x144] sm:$0xf]
      %v420 = vld [vmem:[%s296 + $0x148] sm:$0xf]
      %v421 = vld [vmem:[%s296 + $0x14c] sm:$0xf]
      %v422 = vld [vmem:[%s296 + $0x150] sm:$0xf]
      %v423 = vld [vmem:[%s296 + $0x154] sm:$0xf]
      %v424 = vld [vmem:[%s296 + $0x158] sm:$0xf]
      %v425 = vld [vmem:[%s296 + $0x15c] sm:$0xf]
      %v426 = vld [vmem:[%s296 + $0x160] sm:$0xf]
      %v427 = vld [vmem:[%s296 + $0x164] sm:$0xf]
      %v428 = vld [vmem:[%s296 + $0x168] sm:$0xf]
      %v429 = vld [vmem:[%s296 + $0x16c] sm:$0xf]
      %v430 = vld [vmem:[%s296 + $0x170] sm:$0xf]
      %v431 = vld [vmem:[%s296 + $0x174] sm:$0xf]
      %v432 = vld [vmem:[%s296 + $0x178] sm:$0xf]
      %v433 = vld [vmem:[%s296 + $0x17c] sm:$0xf]
      %v434 = vld [vmem:[%s296 + $0x180] sm:$0xf]
      %v435 = vld [vmem:[%s296 + $0x184] sm:$0xf]
      %v436 = vld [vmem:[%s296 + $0x188] sm:$0xf]
      %v437 = vld [vmem:[%s296 + $0x18c] sm:$0xf]
      %v438 = vld [vmem:[%s296 + $0x190] sm:$0xf]
      %v439 = vld [vmem:[%s296 + $0x194] sm:$0xf]
      %v440 = vld [vmem:[%s296 + $0x198] sm:$0xf]
      %v441 = vld [vmem:[%s296 + $0x19c] sm:$0xf]
      %v442 = vld [vmem:[%s296 + $0x1a0] sm:$0xf]
      %v443 = vld [vmem:[%s296 + $0x1a4] sm:$0xf]
      %v444 = vld [vmem:[%s296 + $0x1a8] sm:$0xf]
      %v445 = vld [vmem:[%s296 + $0x1ac] sm:$0xf]
      %v446 = vld [vmem:[%s296 + $0x1b0] sm:$0xf]
      %v447 = vld [vmem:[%s296 + $0x1b4] sm:$0xf]
      %v448 = vld [vmem:[%s296 + $0x1b8] sm:$0xf]
      %v449 = vld [vmem:[%s296 + $0x1bc] sm:$0xf]
      %v450 = vld [vmem:[%s296 + $0x1c0] sm:$0xf]
      %v451 = vld [vmem:[%s296 + $0x1c4] sm:$0xf]
      %v452 = vld [vmem:[%s296 + $0x1c8] sm:$0xf]
      %v453 = vld [vmem:[%s296 + $0x1cc] sm:$0xf]
      %v454 = vld [vmem:[%s296 + $0x1d0] sm:$0xf]
      %v455 = vld [vmem:[%s296 + $0x1d4] sm:$0xf]
      %v456 = vld [vmem:[%s296 + $0x1d8] sm:$0xf]
      %v457 = vld [vmem:[%s296 + $0x1dc] sm:$0xf]
      %v458 = vld [vmem:[%s296 + $0x1e0] sm:$0xf]
      %v459 = vld [vmem:[%s296 + $0x1e4] sm:$0xf]
      %v460 = vld [vmem:[%s296 + $0x1e8] sm:$0xf]
      %v461 = vld [vmem:[%s296 + $0x1ec] sm:$0xf]
      %v462 = vld [vmem:[%s296 + $0x1f0] sm:$0xf]
      %v463 = vld [vmem:[%s296 + $0x1f4] sm:$0xf]
      %v464 = vld [vmem:[%s296 + $0x1f8] sm:$0xf]
      %v465 = vld [vmem:[%s296 + $0x1fc] sm:$0xf]
      %v466 = vld [vmem:[%s296 + $0x200] sm:$0xf]
      %v467 = vld [vmem:[%s296 + $0x204] sm:$0xf]
      %v468 = vld [vmem:[%s296 + $0x208] sm:$0xf]
      %v469 = vld [vmem:[%s296 + $0x20c] sm:$0xf]
      %v470 = vld [vmem:[%s296 + $0x210] sm:$0xf]
      %v471 = vld [vmem:[%s296 + $0x214] sm:$0xf]
      %v472 = vld [vmem:[%s296 + $0x218] sm:$0xf]
      %v473 = vld [vmem:[%s296 + $0x21c] sm:$0xf]
      %v474 = vld [vmem:[%s296 + $0x220] sm:$0xf]
      %v475 = vld [vmem:[%s296 + $0x224] sm:$0xf]
      %v476 = vld [vmem:[%s296 + $0x228] sm:$0xf]
      %v477 = vld [vmem:[%s296 + $0x22c] sm:$0xf]
      %v478 = vld [vmem:[%s296 + $0x230] sm:$0xf]
      %v479 = vld [vmem:[%s296 + $0x234] sm:$0xf]
      %v480 = vld [vmem:[%s296 + $0x238] sm:$0xf]
      %v481 = vld [vmem:[%s296 + $0x23c] sm:$0xf]
      %v482 = vld [vmem:[%s296 + $0x240] sm:$0xf]
      %v483 = vld [vmem:[%s296 + $0x244] sm:$0xf]
      %v484 = vld [vmem:[%s296 + $0x248] sm:$0xf]
      %v485 = vld [vmem:[%s296 + $0x24c] sm:$0xf]
      %v486 = vld [vmem:[%s296 + $0x250] sm:$0xf]
      %v487 = vld [vmem:[%s296 + $0x254] sm:$0xf]
      %v488 = vld [vmem:[%s296 + $0x258] sm:$0xf]
      %v489 = vld [vmem:[%s296 + $0x25c] sm:$0xf]
      %v490 = vld [vmem:[%s296 + $0x260] sm:$0xf]
      %v491 = vld [vmem:[%s296 + $0x264] sm:$0xf]
      %v492 = vld [vmem:[%s296 + $0x268] sm:$0xf]
      %v493 = vld [vmem:[%s296 + $0x26c] sm:$0xf]
      %v494 = vld [vmem:[%s296 + $0x270] sm:$0xf]
      %v495 = vld [vmem:[%s296 + $0x274] sm:$0xf]
      %v496 = vld [vmem:[%s296 + $0x278] sm:$0xf]
      %v497 = vld [vmem:[%s296 + $0x27c] sm:$0xf]
      %v498 = vld [vmem:[%s296 + $0x280] sm:$0xf]
      %v499 = vld [vmem:[%s296 + $0x284] sm:$0xf]
      %v500 = vld [vmem:[%s296 + $0x288] sm:$0xf]
      %v501 = vld [vmem:[%s296 + $0x28c] sm:$0xf]
      %v502 = vld [vmem:[%s296 + $0x290] sm:$0xf]
      %v503 = vld [vmem:[%s296 + $0x294] sm:$0xf]
      %v504 = vld [vmem:[%s296 + $0x298] sm:$0xf]
      %v505 = vld [vmem:[%s296 + $0x29c] sm:$0xf]
      %v506 = vld [vmem:[%s296 + $0x2a0] sm:$0xf]
      %v507 = vld [vmem:[%s296 + $0x2a4] sm:$0xf]
      %v508 = vld [vmem:[%s296 + $0x2a8] sm:$0xf]
      %v509 = vld [vmem:[%s296 + $0x2ac] sm:$0xf]
      %v510 = vld [vmem:[%s296 + $0x2b0] sm:$0xf]
      %v511 = vld [vmem:[%s296 + $0x2b4] sm:$0xf]
      %v512 = vld [vmem:[%s296 + $0x2b8] sm:$0xf]
      %v513 = vld [vmem:[%s296 + $0x2bc] sm:$0xf]
      %v514 = vld [vmem:[%s296 + $0x2c0] sm:$0xf]
      %v515 = vld [vmem:[%s296 + $0x2c4] sm:$0xf]
      %v516 = vld [vmem:[%s296 + $0x2c8] sm:$0xf]
      %v517 = vld [vmem:[%s296 + $0x2cc] sm:$0xf]
      %v518 = vld [vmem:[%s296 + $0x2d0] sm:$0xf]
      %v519 = vld [vmem:[%s296 + $0x2d4] sm:$0xf]
      %v520 = vld [vmem:[%s296 + $0x2d8] sm:$0xf]
      %v521 = vld [vmem:[%s296 + $0x2dc] sm:$0xf]
      %v522 = vld [vmem:[%s296 + $0x2e0] sm:$0xf]
      %v523 = vld [vmem:[%s296 + $0x2e4] sm:$0xf]
      %v524 = vld [vmem:[%s296 + $0x2e8] sm:$0xf]
      %v525 = vld [vmem:[%s296 + $0x2ec] sm:$0xf]
      %v526 = vld [vmem:[%s296 + $0x2f0] sm:$0xf]
      %v527 = vld [vmem:[%s296 + $0x2f4] sm:$0xf]
      %v528 = vld [vmem:[%s296 + $0x2f8] sm:$0xf]
      %v529 = vld [vmem:[%s296 + $0x2fc] sm:$0xf]
      %v530 = vld [vmem:[%s296 + $0x300] sm:$0xf]
      %v531 = vld [vmem:[%s296 + $0x304] sm:$0xf]
      %v532 = vld [vmem:[%s296 + $0x308] sm:$0xf]
      %v533 = vld [vmem:[%s296 + $0x30c] sm:$0xf]
      %v534 = vld [vmem:[%s296 + $0x310] sm:$0xf]
      %v535 = vld [vmem:[%s296 + $0x314] sm:$0xf]
      %v536 = vld [vmem:[%s296 + $0x318] sm:$0xf]
      %v537 = vld [vmem:[%s296 + $0x31c] sm:$0xf]
      %v538 = vld [vmem:[%s296 + $0x320] sm:$0xf]
      %v539 = vld [vmem:[%s296 + $0x324] sm:$0xf]
      %v540 = vld [vmem:[%s296 + $0x328] sm:$0xf]
      %v541 = vld [vmem:[%s296 + $0x32c] sm:$0xf]
      %v542 = vld [vmem:[%s296 + $0x330] sm:$0xf]
      %v543 = vld [vmem:[%s296 + $0x334] sm:$0xf]
      %v544 = vld [vmem:[%s296 + $0x338] sm:$0xf]
      %v545 = vld [vmem:[%s296 + $0x33c] sm:$0xf]
      %v546 = vld [vmem:[%s296 + $0x340] sm:$0xf]
      %v547 = vld [vmem:[%s296 + $0x344] sm:$0xf]
      %v548 = vld [vmem:[%s296 + $0x348] sm:$0xf]
      %v549 = vld [vmem:[%s296 + $0x34c] sm:$0xf]
      %v550 = vld [vmem:[%s296 + $0x350] sm:$0xf]
      %v551 = vld [vmem:[%s296 + $0x354] sm:$0xf]
      %v552 = vld [vmem:[%s296 + $0x358] sm:$0xf]
      %v553 = vld [vmem:[%s296 + $0x35c] sm:$0xf]
      %v554 = vld [vmem:[%s296 + $0x360] sm:$0xf]
      %v555 = vld [vmem:[%s296 + $0x364] sm:$0xf]
      %v556 = vld [vmem:[%s296 + $0x368] sm:$0xf]
      %v557 = vld [vmem:[%s296 + $0x36c] sm:$0xf]
      %v558 = vld [vmem:[%s296 + $0x370] sm:$0xf]
      %v559 = vld [vmem:[%s296 + $0x374] sm:$0xf]
      %v560 = vld [vmem:[%s296 + $0x378] sm:$0xf]
      %v561 = vld [vmem:[%s296 + $0x37c] sm:$0xf]
      %v562 = vld [vmem:[%s296 + $0x380] sm:$0xf]
      %v563 = vld [vmem:[%s296 + $0x384] sm:$0xf]
      %v564 = vld [vmem:[%s296 + $0x388] sm:$0xf]
      %v565 = vld [vmem:[%s296 + $0x38c] sm:$0xf]
      %v566 = vld [vmem:[%s296 + $0x390] sm:$0xf]
      %v567 = vld [vmem:[%s296 + $0x394] sm:$0xf]
      %v568 = vld [vmem:[%s296 + $0x398] sm:$0xf]
      %v569 = vld [vmem:[%s296 + $0x39c] sm:$0xf]
      %v570 = vld [vmem:[%s296 + $0x3a0] sm:$0xf]
      %v571 = vld [vmem:[%s296 + $0x3a4] sm:$0xf]
      %v572 = vld [vmem:[%s296 + $0x3a8] sm:$0xf]
      %v573 = vld [vmem:[%s296 + $0x3ac] sm:$0xf]
      %v574 = vld [vmem:[%s296 + $0x3b0] sm:$0xf]
      %v575 = vld [vmem:[%s296 + $0x3b4] sm:$0xf]
      %v576 = vld [vmem:[%s296 + $0x3b8] sm:$0xf]
      %v577 = vld [vmem:[%s296 + $0x3bc] sm:$0xf]
      %v578 = vld [vmem:[%s296 + $0x3c0] sm:$0xf]
      %v579 = vld [vmem:[%s296 + $0x3c4] sm:$0xf]
      %v580 = vld [vmem:[%s296 + $0x3c8] sm:$0xf]
      %v581 = vld [vmem:[%s296 + $0x3cc] sm:$0xf]
      %v582 = vld [vmem:[%s296 + $0x3d0] sm:$0xf]
      %v583 = vld [vmem:[%s296 + $0x3d4] sm:$0xf]
      %v584 = vld [vmem:[%s296 + $0x3d8] sm:$0xf]
      %v585 = vld [vmem:[%s296 + $0x3dc] sm:$0xf]
      %v586 = vld [vmem:[%s296 + $0x3e0] sm:$0xf]
      %v587 = vld [vmem:[%s296 + $0x3e4] sm:$0xf]
      %v588 = vld [vmem:[%s296 + $0x3e8] sm:$0xf]
      %v589 = vld [vmem:[%s296 + $0x3ec] sm:$0xf]
      %v590 = vld [vmem:[%s296 + $0x3f0] sm:$0xf]
      %v591 = vld [vmem:[%s296 + $0x3f4] sm:$0xf]
      %v592 = vld [vmem:[%s296 + $0x3f8] sm:$0xf]
      %v593 = vld [vmem:[%s296 + $0x3fc] sm:$0xf]
      %v594 = vld [vmem:[%s296 + $0x400] sm:$0xf]
      %v595 = vld [vmem:[%s296 + $0x404] sm:$0xf]
      %v596 = vld [vmem:[%s296 + $0x408] sm:$0xf]
      %v597 = vld [vmem:[%s296 + $0x40c] sm:$0xf]
      %v598 = vld [vmem:[%s296 + $0x410] sm:$0xf]
      %v599 = vld [vmem:[%s296 + $0x414] sm:$0xf]
      %v600 = vld [vmem:[%s296 + $0x418] sm:$0xf]
      %v601 = vld [vmem:[%s296 + $0x41c] sm:$0xf]
      %v602 = vld [vmem:[%s296 + $0x420] sm:$0xf]
      %v603 = vld [vmem:[%s296 + $0x424] sm:$0xf]
      %v604 = vld [vmem:[%s296 + $0x428] sm:$0xf]
      %v605 = vld [vmem:[%s296 + $0x42c] sm:$0xf]
      %v606 = vld [vmem:[%s296 + $0x430] sm:$0xf]
      %v607 = vld [vmem:[%s296 + $0x434] sm:$0xf]
      %v608 = vld [vmem:[%s296 + $0x438] sm:$0xf]
      %v609 = vld [vmem:[%s296 + $0x43c] sm:$0xf]
      %v610 = vld [vmem:[%s296 + $0x440] sm:$0xf]
      %v611 = vld [vmem:[%s296 + $0x444] sm:$0xf]
      %v612 = vld [vmem:[%s296 + $0x448] sm:$0xf]
      %v613 = vld [vmem:[%s296 + $0x44c] sm:$0xf]
      %v614 = vld [vmem:[%s296 + $0x450] sm:$0xf]
      %v615 = vld [vmem:[%s296 + $0x454] sm:$0xf]
      %v616 = vld [vmem:[%s296 + $0x458] sm:$0xf]
      %v617 = vld [vmem:[%s296 + $0x45c] sm:$0xf]
      %v618 = vld [vmem:[%s296 + $0x460] sm:$0xf]
      %v619 = vld [vmem:[%s296 + $0x464] sm:$0xf]
      %v620 = vld [vmem:[%s296 + $0x468] sm:$0xf]
      %v621 = vld [vmem:[%s296 + $0x46c] sm:$0xf]
      %v622 = vld [vmem:[%s296 + $0x470] sm:$0xf]
      %v623 = vld [vmem:[%s296 + $0x474] sm:$0xf]
      %v624 = vld [vmem:[%s296 + $0x478] sm:$0xf]
      %v625 = vld [vmem:[%s296 + $0x47c] sm:$0xf]
      %v626 = vld [vmem:[%s296 + $0x480] sm:$0xf]
      %v627 = vld [vmem:[%s296 + $0x484] sm:$0xf]
      %v628 = vld [vmem:[%s296 + $0x488] sm:$0xf]
      %v629 = vld [vmem:[%s296 + $0x48c] sm:$0xf]
      %v630 = vld [vmem:[%s296 + $0x490] sm:$0xf]
      %v631 = vld [vmem:[%s296 + $0x494] sm:$0xf]
      %v632 = vld [vmem:[%s296 + $0x498] sm:$0xf]
      %v633 = vld [vmem:[%s296 + $0x49c] sm:$0xf]
      %v634 = vld [vmem:[%s296 + $0x4a0] sm:$0xf]
      %v635 = vld [vmem:[%s296 + $0x4a4] sm:$0xf]
      %v636 = vld [vmem:[%s296 + $0x4a8] sm:$0xf]
      %v637 = vld [vmem:[%s296 + $0x4ac] sm:$0xf]
      %v638 = vld [vmem:[%s296 + $0x4b0] sm:$0xf]
      %v639 = vld [vmem:[%s296 + $0x4b4] sm:$0xf]
      %v640 = vld [vmem:[%s296 + $0x4b8] sm:$0xf]
      %v641 = vld [vmem:[%s296 + $0x4bc] sm:$0xf]
      %v642 = vld [vmem:[%s296 + $0x4c0] sm:$0xf]
      %v643 = vld [vmem:[%s296 + $0x4c4] sm:$0xf]
      %v644 = vld [vmem:[%s296 + $0x4c8] sm:$0xf]
      %v645 = vld [vmem:[%s296 + $0x4cc] sm:$0xf]
      %v646 = vld [vmem:[%s296 + $0x4d0] sm:$0xf]
      %v647 = vld [vmem:[%s296 + $0x4d4] sm:$0xf]
      %v648 = vld [vmem:[%s296 + $0x4d8] sm:$0xf]
      %v649 = vld [vmem:[%s296 + $0x4dc] sm:$0xf]
      %v650 = vld [vmem:[%s296 + $0x4e0] sm:$0xf]
      %v651 = vld [vmem:[%s296 + $0x4e4] sm:$0xf]
      %v652 = vld [vmem:[%s296 + $0x4e8] sm:$0xf]
      %v653 = vld [vmem:[%s296 + $0x4ec] sm:$0xf]
      %v654 = vld [vmem:[%s296 + $0x4f0] sm:$0xf]
      %v655 = vld [vmem:[%s296 + $0x4f4] sm:$0xf]
      %v656 = vld [vmem:[%s296 + $0x4f8] sm:$0xf]
      %v657 = vld [vmem:[%s296 + $0x4fc] sm:$0xf]
      %v658 = vld [vmem:[%s296 + $0x500] sm:$0xf]
      %v659 = vld [vmem:[%s296 + $0x504] sm:$0xf]
      %v660 = vld [vmem:[%s296 + $0x508] sm:$0xf]
      %v661 = vld [vmem:[%s296 + $0x50c] sm:$0xf]
      %v662 = vld [vmem:[%s296 + $0x510] sm:$0xf]
      %v663 = vld [vmem:[%s296 + $0x514] sm:$0xf]
      %v664 = vld [vmem:[%s296 + $0x518] sm:$0xf]
      %v665 = vld [vmem:[%s296 + $0x51c] sm:$0xf]
      %v666 = vld [vmem:[%s296 + $0x520] sm:$0xf]
      %v667 = vld [vmem:[%s296 + $0x524] sm:$0xf]
      %v668 = vld [vmem:[%s296 + $0x528] sm:$0xf]
      %v669 = vld [vmem:[%s296 + $0x52c] sm:$0xf]
      %v670 = vld [vmem:[%s296 + $0x530] sm:$0xf]
      %v671 = vld [vmem:[%s296 + $0x534] sm:$0xf]
      %v672 = vld [vmem:[%s296 + $0x538] sm:$0xf]
      %v673 = vld [vmem:[%s296 + $0x53c] sm:$0xf]
      %v674 = vld [vmem:[%s296 + $0x540] sm:$0xf]
      %v675 = vld [vmem:[%s296 + $0x544] sm:$0xf]
      %v676 = vld [vmem:[%s296 + $0x548] sm:$0xf]
      %v677 = vld [vmem:[%s296 + $0x54c] sm:$0xf]
      %v678 = vld [vmem:[%s296 + $0x550] sm:$0xf]
      %v679 = vld [vmem:[%s296 + $0x554] sm:$0xf]
      %v680 = vld [vmem:[%s296 + $0x558] sm:$0xf]
      %v681 = vld [vmem:[%s296 + $0x55c] sm:$0xf]
      %v682 = vld [vmem:[%s296 + $0x560] sm:$0xf]
      %v683 = vld [vmem:[%s296 + $0x564] sm:$0xf]
      %v684 = vld [vmem:[%s296 + $0x568] sm:$0xf]
      %v685 = vld [vmem:[%s296 + $0x56c] sm:$0xf]
      %v686 = vld [vmem:[%s296 + $0x570] sm:$0xf]
      %v687 = vld [vmem:[%s296 + $0x574] sm:$0xf]
      %v688 = vld [vmem:[%s296 + $0x578] sm:$0xf]
      %v689 = vld [vmem:[%s296 + $0x57c] sm:$0xf]
      %v690 = vld [vmem:[%s296 + $0x580] sm:$0xf]
      %v691 = vld [vmem:[%s296 + $0x584] sm:$0xf]
      %v692 = vld [vmem:[%s296 + $0x588] sm:$0xf]
      %v693 = vld [vmem:[%s296 + $0x58c] sm:$0xf]
      %v694 = vld [vmem:[%s296 + $0x590] sm:$0xf]
      %v695 = vld [vmem:[%s296 + $0x594] sm:$0xf]
      %v696 = vld [vmem:[%s296 + $0x598] sm:$0xf]
      %v697 = vld [vmem:[%s296 + $0x59c] sm:$0xf]
      %v698 = vld [vmem:[%s296 + $0x5a0] sm:$0xf]
      %v699 = vld [vmem:[%s296 + $0x5a4] sm:$0xf]
      %v700 = vld [vmem:[%s296 + $0x5a8] sm:$0xf]
      %v701 = vld [vmem:[%s296 + $0x5ac] sm:$0xf]
      %v702 = vld [vmem:[%s296 + $0x5b0] sm:$0xf]
      %v703 = vld [vmem:[%s296 + $0x5b4] sm:$0xf]
      %v704 = vld [vmem:[%s296 + $0x5b8] sm:$0xf]
      %v705 = vld [vmem:[%s296 + $0x5bc] sm:$0xf]
      %v706 = vld [vmem:[%s296 + $0x5c0] sm:$0xf]
      %v707 = vld [vmem:[%s296 + $0x5c4] sm:$0xf]
      %v708 = vld [vmem:[%s296 + $0x5c8] sm:$0xf]
      %v709 = vld [vmem:[%s296 + $0x5cc] sm:$0xf]
      %v710 = vld [vmem:[%s296 + $0x5d0] sm:$0xf]
      %v711 = vld [vmem:[%s296 + $0x5d4] sm:$0xf]
      %v712 = vld [vmem:[%s296 + $0x5d8] sm:$0xf]
      %v713 = vld [vmem:[%s296 + $0x5dc] sm:$0xf]
      %v714 = vld [vmem:[%s296 + $0x5e0] sm:$0xf]
      %v715 = vld [vmem:[%s296 + $0x5e4] sm:$0xf]
      %v716 = vld [vmem:[%s296 + $0x5e8] sm:$0xf]
      %v717 = vld [vmem:[%s296 + $0x5ec] sm:$0xf]
      %v718 = vld [vmem:[%s296 + $0x5f0] sm:$0xf]
      %v719 = vld [vmem:[%s296 + $0x5f4] sm:$0xf]
      %v720 = vld [vmem:[%s296 + $0x5f8] sm:$0xf]
      %v721 = vld [vmem:[%s296 + $0x5fc] sm:$0xf]
      %v746 = vunpack.c.l.b16 %v314
      %v747 = vunpack.c.h.b16 %v314
      %v748 = vunpack.c.l.b16 %v315
      %v749 = vunpack.c.h.b16 %v315
      %v750 = vunpack.c.l.b16 %v316
      %v751 = vunpack.c.h.b16 %v316
      %v752 = vunpack.c.l.b16 %v317
      %v753 = vunpack.c.h.b16 %v317
      %v754 = vunpack.c.l.b16 %v318
      %v755 = vunpack.c.h.b16 %v318
      %v756 = vunpack.c.l.b16 %v319
      %v757 = vunpack.c.h.b16 %v319
      %v758 = vunpack.c.l.b16 %v320
      %v759 = vunpack.c.h.b16 %v320
      %v760 = vunpack.c.l.b16 %v321
      %v761 = vunpack.c.h.b16 %v321
      %v762 = vunpack.c.l.b16 %v322
      %v763 = vunpack.c.h.b16 %v322
      %v764 = vunpack.c.l.b16 %v323
      %v765 = vunpack.c.h.b16 %v323
      %v766 = vunpack.c.l.b16 %v324
      %v767 = vunpack.c.h.b16 %v324
      %v768 = vunpack.c.l.b16 %v325
      %v769 = vunpack.c.h.b16 %v325
      %v770 = vunpack.c.l.b16 %v326
      %v771 = vunpack.c.h.b16 %v326
      %v772 = vunpack.c.l.b16 %v327
      %v773 = vunpack.c.h.b16 %v327
      %v774 = vunpack.c.l.b16 %v328
      %v775 = vunpack.c.h.b16 %v328
      %v776 = vunpack.c.l.b16 %v329
      %v777 = vunpack.c.h.b16 %v329
      %v778 = vunpack.c.l.b16 %v330
      %v779 = vunpack.c.h.b16 %v330
      %v780 = vunpack.c.l.b16 %v331
      %v781 = vunpack.c.h.b16 %v331
      %v782 = vunpack.c.l.b16 %v332
      %v783 = vunpack.c.h.b16 %v332
      %v784 = vunpack.c.l.b16 %v333
      %v785 = vunpack.c.h.b16 %v333
      %v786 = vunpack.c.l.b16 %v334
      %v787 = vunpack.c.h.b16 %v334
      %v788 = vunpack.c.l.b16 %v335
      %v789 = vunpack.c.h.b16 %v335
      %v790 = vunpack.c.l.b16 %v336
      %v791 = vunpack.c.h.b16 %v336
      %v792 = vunpack.c.l.b16 %v337
      %v793 = vunpack.c.h.b16 %v337
      %v794 = vpack.c.b16 %v770, %v746
      %v795 = vpack.c.b16 %v771, %v747
      %v796 = vpack.c.b16 %v772, %v748
      %v797 = vpack.c.b16 %v773, %v749
      %v798 = vpack.c.b16 %v774, %v750
      %v799 = vpack.c.b16 %v775, %v751
      %v800 = vpack.c.b16 %v776, %v752
      %v801 = vpack.c.b16 %v777, %v753
      %v802 = vpack.c.b16 %v778, %v754
      %v803 = vpack.c.b16 %v779, %v755
      %v804 = vpack.c.b16 %v780, %v756
      %v805 = vpack.c.b16 %v781, %v757
      %v806 = vpack.c.b16 %v782, %v758
      %v807 = vpack.c.b16 %v783, %v759
      %v808 = vpack.c.b16 %v784, %v760
      %v809 = vpack.c.b16 %v785, %v761
      %v810 = vpack.c.b16 %v786, %v762
      %v811 = vpack.c.b16 %v787, %v763
      %v812 = vpack.c.b16 %v788, %v764
      %v813 = vpack.c.b16 %v789, %v765
      %v814 = vpack.c.b16 %v790, %v766
      %v815 = vpack.c.b16 %v791, %v767
      %v816 = vpack.c.b16 %v792, %v768
      %v817 = vpack.c.b16 %v793, %v769
      %v1226 = vunpack.c.l.b16 %v338
      %v1227 = vunpack.c.l.b16 %v339
      %v1228 = vunpack.c.l.b16 %v340
      %v1229 = vunpack.c.l.b16 %v341
      %v1230 = vunpack.c.l.b16 %v342
      %v1231 = vunpack.c.l.b16 %v343
      %v1232 = vunpack.c.l.b16 %v344
      %v1233 = vunpack.c.l.b16 %v345
      %v1234 = vunpack.c.l.b16 %v346
      %v1235 = vunpack.c.l.b16 %v347
      %v1236 = vunpack.c.l.b16 %v348
      %v1237 = vunpack.c.l.b16 %v349
      %v1238 = vunpack.c.l.b16 %v350
      %v1239 = vunpack.c.l.b16 %v351
      %v1240 = vunpack.c.l.b16 %v352
      %v1241 = vunpack.c.l.b16 %v353
      %v1242 = vunpack.c.l.b16 %v354
      %v1243 = vunpack.c.l.b16 %v355
      %v1244 = vunpack.c.l.b16 %v356
      %v1245 = vunpack.c.l.b16 %v357
      %v1246 = vunpack.c.l.b16 %v358
      %v1247 = vunpack.c.l.b16 %v359
      %v1248 = vunpack.c.l.b16 %v360
      %v1249 = vunpack.c.l.b16 %v361
      %v1250 = vunpack.c.l.b16 %v362
      %v1251 = vunpack.c.l.b16 %v363
      %v1252 = vunpack.c.l.b16 %v364
      %v1253 = vunpack.c.l.b16 %v365
      %v1254 = vunpack.c.l.b16 %v366
      %v1255 = vunpack.c.l.b16 %v367
      %v1256 = vunpack.c.l.b16 %v368
      %v1257 = vunpack.c.l.b16 %v369
      %v1258 = vunpack.c.l.b16 %v370
      %v1259 = vunpack.c.l.b16 %v371
      %v1260 = vunpack.c.l.b16 %v372
      %v1261 = vunpack.c.l.b16 %v373
      %v1262 = vunpack.c.l.b16 %v374
      %v1263 = vunpack.c.l.b16 %v375
      %v1264 = vunpack.c.l.b16 %v376
      %v1265 = vunpack.c.l.b16 %v377
      %v1266 = vunpack.c.l.b16 %v378
      %v1267 = vunpack.c.l.b16 %v379
      %v1268 = vunpack.c.l.b16 %v380
      %v1269 = vunpack.c.l.b16 %v381
      %v1270 = vunpack.c.l.b16 %v382
      %v1271 = vunpack.c.l.b16 %v383
      %v1272 = vunpack.c.l.b16 %v384
      %v1273 = vunpack.c.l.b16 %v385
      %v1274 = vunpack.c.l.b16 %v386
      %v1275 = vunpack.c.l.b16 %v387
      %v1276 = vunpack.c.l.b16 %v388
      %v1277 = vunpack.c.l.b16 %v389
      %v1278 = vunpack.c.l.b16 %v390
      %v1279 = vunpack.c.l.b16 %v391
      %v1280 = vunpack.c.l.b16 %v392
      %v1281 = vunpack.c.l.b16 %v393
      %v1282 = vunpack.c.l.b16 %v394
      %v1283 = vunpack.c.l.b16 %v395
      %v1284 = vunpack.c.l.b16 %v396
      %v1285 = vunpack.c.l.b16 %v397
      %v1286 = vunpack.c.l.b16 %v398
      %v1287 = vunpack.c.l.b16 %v399
      %v1288 = vunpack.c.l.b16 %v400
      %v1289 = vunpack.c.l.b16 %v401
      %v1290 = vunpack.c.l.b16 %v402
      %v1291 = vunpack.c.l.b16 %v403
      %v1292 = vunpack.c.l.b16 %v404
      %v1293 = vunpack.c.l.b16 %v405
      %v1294 = vunpack.c.l.b16 %v406
      %v1295 = vunpack.c.l.b16 %v407
      %v1296 = vunpack.c.l.b16 %v408
      %v1297 = vunpack.c.l.b16 %v409
      %v1298 = vunpack.c.l.b16 %v410
      %v1299 = vunpack.c.l.b16 %v411
      %v1300 = vunpack.c.l.b16 %v412
      %v1301 = vunpack.c.l.b16 %v413
      %v1302 = vunpack.c.l.b16 %v414
      %v1303 = vunpack.c.l.b16 %v415
      %v1304 = vunpack.c.l.b16 %v416
      %v1305 = vunpack.c.l.b16 %v417
      %v1306 = vunpack.c.l.b16 %v418
      %v1307 = vunpack.c.l.b16 %v419
      %v1308 = vunpack.c.l.b16 %v420
      %v1309 = vunpack.c.l.b16 %v421
      %v1310 = vunpack.c.l.b16 %v422
      %v1311 = vunpack.c.l.b16 %v423
      %v1312 = vunpack.c.l.b16 %v424
      %v1313 = vunpack.c.l.b16 %v425
      %v1314 = vunpack.c.l.b16 %v426
      %v1315 = vunpack.c.l.b16 %v427
      %v1316 = vunpack.c.l.b16 %v428
      %v1317 = vunpack.c.l.b16 %v429
      %v1318 = vunpack.c.l.b16 %v430
      %v1319 = vunpack.c.l.b16 %v431
      %v1320 = vunpack.c.l.b16 %v432
      %v1321 = vunpack.c.l.b16 %v433
      %v1322 = vunpack.c.l.b16 %v434
      %v1323 = vunpack.c.l.b16 %v435
      %v1324 = vunpack.c.l.b16 %v436
      %v1325 = vunpack.c.l.b16 %v437
      %v1326 = vunpack.c.l.b16 %v438
      %v1327 = vunpack.c.l.b16 %v439
      %v1328 = vunpack.c.l.b16 %v440
      %v1329 = vunpack.c.l.b16 %v441
      %v1330 = vunpack.c.l.b16 %v442
      %v1331 = vunpack.c.l.b16 %v443
      %v1332 = vunpack.c.l.b16 %v444
      %v1333 = vunpack.c.l.b16 %v445
      %v1334 = vunpack.c.l.b16 %v446
      %v1335 = vunpack.c.l.b16 %v447
      %v1336 = vunpack.c.l.b16 %v448
      %v1337 = vunpack.c.l.b16 %v449
      %v1338 = vunpack.c.l.b16 %v450
      %v1339 = vunpack.c.l.b16 %v451
      %v1340 = vunpack.c.l.b16 %v452
      %v1341 = vunpack.c.l.b16 %v453
      %v1342 = vunpack.c.l.b16 %v454
      %v1343 = vunpack.c.l.b16 %v455
      %v1344 = vunpack.c.l.b16 %v456
      %v1345 = vunpack.c.l.b16 %v457
      %v1346 = vunpack.c.l.b16 %v458
      %v1347 = vunpack.c.l.b16 %v459
      %v1348 = vunpack.c.l.b16 %v460
      %v1349 = vunpack.c.l.b16 %v461
      %v1350 = vunpack.c.l.b16 %v462
      %v1351 = vunpack.c.l.b16 %v463
      %v1352 = vunpack.c.l.b16 %v464
      %v1353 = vunpack.c.l.b16 %v465
      %v1354 = vunpack.c.l.b16 %v466
      %v1355 = vunpack.c.l.b16 %v467
      %v1356 = vunpack.c.l.b16 %v468
      %v1357 = vunpack.c.l.b16 %v469
      %v1358 = vunpack.c.l.b16 %v470
      %v1359 = vunpack.c.l.b16 %v471
      %v1360 = vunpack.c.l.b16 %v472
      %v1361 = vunpack.c.l.b16 %v473
      %v1362 = vunpack.c.l.b16 %v474
      %v1363 = vunpack.c.l.b16 %v475
      %v1364 = vunpack.c.l.b16 %v476
      %v1365 = vunpack.c.l.b16 %v477
      %v1366 = vunpack.c.l.b16 %v478
      %v1367 = vunpack.c.l.b16 %v479
      %v1368 = vunpack.c.l.b16 %v480
      %v1369 = vunpack.c.l.b16 %v481
      %v1370 = vunpack.c.l.b16 %v482
      %v1371 = vunpack.c.l.b16 %v483
      %v1372 = vunpack.c.l.b16 %v484
      %v1373 = vunpack.c.l.b16 %v485
      %v1374 = vunpack.c.l.b16 %v486
      %v1375 = vunpack.c.l.b16 %v487
      %v1376 = vunpack.c.l.b16 %v488
      %v1377 = vunpack.c.l.b16 %v489
      %v1378 = vunpack.c.l.b16 %v490
      %v1379 = vunpack.c.l.b16 %v491
      %v1380 = vunpack.c.l.b16 %v492
      %v1381 = vunpack.c.l.b16 %v493
      %v1382 = vunpack.c.l.b16 %v494
      %v1383 = vunpack.c.l.b16 %v495
      %v1384 = vunpack.c.l.b16 %v496
      %v1385 = vunpack.c.l.b16 %v497
      %v1386 = vunpack.c.l.b16 %v498
      %v1387 = vunpack.c.l.b16 %v499
      %v1388 = vunpack.c.l.b16 %v500
      %v1389 = vunpack.c.l.b16 %v501
      %v1390 = vunpack.c.l.b16 %v502
      %v1391 = vunpack.c.l.b16 %v503
      %v1392 = vunpack.c.l.b16 %v504
      %v1393 = vunpack.c.l.b16 %v505
      %v1394 = vunpack.c.l.b16 %v506
      %v1395 = vunpack.c.l.b16 %v507
      %v1396 = vunpack.c.l.b16 %v508
      %v1397 = vunpack.c.l.b16 %v509
      %v1398 = vunpack.c.l.b16 %v510
      %v1399 = vunpack.c.l.b16 %v511
      %v1400 = vunpack.c.l.b16 %v512
      %v1401 = vunpack.c.l.b16 %v513
      %v1402 = vunpack.c.l.b16 %v514
      %v1403 = vunpack.c.l.b16 %v515
      %v1404 = vunpack.c.l.b16 %v516
      %v1405 = vunpack.c.l.b16 %v517
      %v1406 = vunpack.c.l.b16 %v518
      %v1407 = vunpack.c.l.b16 %v519
      %v1408 = vunpack.c.l.b16 %v520
      %v1409 = vunpack.c.l.b16 %v521
      %v1410 = vunpack.c.l.b16 %v522
      %v1411 = vunpack.c.l.b16 %v523
      %v1412 = vunpack.c.l.b16 %v524
      %v1413 = vunpack.c.l.b16 %v525
      %v1414 = vunpack.c.l.b16 %v526
      %v1415 = vunpack.c.l.b16 %v527
      %v1416 = vunpack.c.l.b16 %v528
      %v1417 = vunpack.c.l.b16 %v529
      %v1418 = vunpack.c.l.b16 %v530
      %v1419 = vunpack.c.l.b16 %v531
      %v1420 = vunpack.c.l.b16 %v532
      %v1421 = vunpack.c.l.b16 %v533
      %v1422 = vunpack.c.l.b16 %v534
      %v1423 = vunpack.c.l.b16 %v535
      %v1424 = vunpack.c.l.b16 %v536
      %v1425 = vunpack.c.l.b16 %v537
      %v1426 = vunpack.c.l.b16 %v538
      %v1427 = vunpack.c.l.b16 %v539
      %v1428 = vunpack.c.l.b16 %v540
      %v1429 = vunpack.c.l.b16 %v541
      %v1430 = vunpack.c.l.b16 %v542
      %v1431 = vunpack.c.l.b16 %v543
      %v1432 = vunpack.c.l.b16 %v544
      %v1433 = vunpack.c.l.b16 %v545
      %v1434 = vunpack.c.l.b16 %v546
      %v1435 = vunpack.c.l.b16 %v547
      %v1436 = vunpack.c.l.b16 %v548
      %v1437 = vunpack.c.l.b16 %v549
      %v1438 = vunpack.c.l.b16 %v550
      %v1439 = vunpack.c.l.b16 %v551
      %v1440 = vunpack.c.l.b16 %v552
      %v1441 = vunpack.c.l.b16 %v553
      %v1442 = vunpack.c.l.b16 %v554
      %v1443 = vunpack.c.l.b16 %v555
      %v1444 = vunpack.c.l.b16 %v556
      %v1445 = vunpack.c.l.b16 %v557
      %v1446 = vunpack.c.l.b16 %v558
      %v1447 = vunpack.c.l.b16 %v559
      %v1448 = vunpack.c.l.b16 %v560
      %v1449 = vunpack.c.l.b16 %v561
      %v1450 = vunpack.c.l.b16 %v562
      %v1451 = vunpack.c.l.b16 %v563
      %v1452 = vunpack.c.l.b16 %v564
      %v1453 = vunpack.c.l.b16 %v565
      %v1454 = vunpack.c.l.b16 %v566
      %v1455 = vunpack.c.l.b16 %v567
      %v1456 = vunpack.c.l.b16 %v568
      %v1457 = vunpack.c.l.b16 %v569
      %v1458 = vunpack.c.l.b16 %v570
      %v1459 = vunpack.c.l.b16 %v571
      %v1460 = vunpack.c.l.b16 %v572
      %v1461 = vunpack.c.l.b16 %v573
      %v1462 = vunpack.c.l.b16 %v574
      %v1463 = vunpack.c.l.b16 %v575
      %v1464 = vunpack.c.l.b16 %v576
      %v1465 = vunpack.c.l.b16 %v577
      %v1466 = vunpack.c.l.b16 %v578
      %v1467 = vunpack.c.l.b16 %v579
      %v1468 = vunpack.c.l.b16 %v580
      %v1469 = vunpack.c.l.b16 %v581
      %v1470 = vunpack.c.l.b16 %v582
      %v1471 = vunpack.c.l.b16 %v583
      %v1472 = vunpack.c.l.b16 %v584
      %v1473 = vunpack.c.l.b16 %v585
      %v1474 = vunpack.c.l.b16 %v586
      %v1475 = vunpack.c.l.b16 %v587
      %v1476 = vunpack.c.l.b16 %v588
      %v1477 = vunpack.c.l.b16 %v589
      %v1478 = vunpack.c.l.b16 %v590
      %v1479 = vunpack.c.l.b16 %v591
      %v1480 = vunpack.c.l.b16 %v592
      %v1481 = vunpack.c.l.b16 %v593
      %v1482 = vunpack.c.l.b16 %v594
      %v1483 = vunpack.c.l.b16 %v595
      %v1484 = vunpack.c.l.b16 %v596
      %v1485 = vunpack.c.l.b16 %v597
      %v1486 = vunpack.c.l.b16 %v598
      %v1487 = vunpack.c.l.b16 %v599
      %v1488 = vunpack.c.l.b16 %v600
      %v1489 = vunpack.c.l.b16 %v601
      %v1490 = vunpack.c.l.b16 %v602
      %v1491 = vunpack.c.l.b16 %v603
      %v1492 = vunpack.c.l.b16 %v604
      %v1493 = vunpack.c.l.b16 %v605
      %v1494 = vunpack.c.l.b16 %v606
      %v1495 = vunpack.c.l.b16 %v607
      %v1496 = vunpack.c.l.b16 %v608
      %v1497 = vunpack.c.l.b16 %v609
      %v1498 = vunpack.c.l.b16 %v610
      %v1499 = vunpack.c.l.b16 %v611
      %v1500 = vunpack.c.l.b16 %v612
      %v1501 = vunpack.c.l.b16 %v613
      %v1502 = vunpack.c.l.b16 %v614
      %v1503 = vunpack.c.l.b16 %v615
      %v1504 = vunpack.c.l.b16 %v616
      %v1505 = vunpack.c.l.b16 %v617
      %v1506 = vunpack.c.l.b16 %v618
      %v1507 = vunpack.c.l.b16 %v619
      %v1508 = vunpack.c.l.b16 %v620
      %v1509 = vunpack.c.l.b16 %v621
      %v1510 = vunpack.c.l.b16 %v622
      %v1511 = vunpack.c.l.b16 %v623
      %v1512 = vunpack.c.l.b16 %v624
      %v1513 = vunpack.c.l.b16 %v625
      %v1514 = vunpack.c.l.b16 %v626
      %v1515 = vunpack.c.l.b16 %v627
      %v1516 = vunpack.c.l.b16 %v628
      %v1517 = vunpack.c.l.b16 %v629
      %v1518 = vunpack.c.l.b16 %v630
      %v1519 = vunpack.c.l.b16 %v631
      %v1520 = vunpack.c.l.b16 %v632
      %v1521 = vunpack.c.l.b16 %v633
      %v1522 = vunpack.c.l.b16 %v634
      %v1523 = vunpack.c.l.b16 %v635
      %v1524 = vunpack.c.l.b16 %v636
      %v1525 = vunpack.c.l.b16 %v637
      %v1526 = vunpack.c.l.b16 %v638
      %v1527 = vunpack.c.l.b16 %v639
      %v1528 = vunpack.c.l.b16 %v640
      %v1529 = vunpack.c.l.b16 %v641
      %v1530 = vunpack.c.l.b16 %v642
      %v1531 = vunpack.c.l.b16 %v643
      %v1532 = vunpack.c.l.b16 %v644
      %v1533 = vunpack.c.l.b16 %v645
      %v1534 = vunpack.c.l.b16 %v646
      %v1535 = vunpack.c.l.b16 %v647
      %v1536 = vunpack.c.l.b16 %v648
      %v1537 = vunpack.c.l.b16 %v649
      %v1538 = vunpack.c.l.b16 %v650
      %v1539 = vunpack.c.l.b16 %v651
      %v1540 = vunpack.c.l.b16 %v652
      %v1541 = vunpack.c.l.b16 %v653
      %v1542 = vunpack.c.l.b16 %v654
      %v1543 = vunpack.c.l.b16 %v655
      %v1544 = vunpack.c.l.b16 %v656
      %v1545 = vunpack.c.l.b16 %v657
      %v1546 = vunpack.c.l.b16 %v658
      %v1547 = vunpack.c.l.b16 %v659
      %v1548 = vunpack.c.l.b16 %v660
      %v1549 = vunpack.c.l.b16 %v661
      %v1550 = vunpack.c.l.b16 %v662
      %v1551 = vunpack.c.l.b16 %v663
      %v1552 = vunpack.c.l.b16 %v664
      %v1553 = vunpack.c.l.b16 %v665
      %v1554 = vunpack.c.l.b16 %v666
      %v1555 = vunpack.c.l.b16 %v667
      %v1556 = vunpack.c.l.b16 %v668
      %v1557 = vunpack.c.l.b16 %v669
      %v1558 = vunpack.c.l.b16 %v670
      %v1559 = vunpack.c.l.b16 %v671
      %v1560 = vunpack.c.l.b16 %v672
      %v1561 = vunpack.c.l.b16 %v673
      %v1562 = vunpack.c.l.b16 %v674
      %v1563 = vunpack.c.l.b16 %v675
      %v1564 = vunpack.c.l.b16 %v676
      %v1565 = vunpack.c.l.b16 %v677
      %v1566 = vunpack.c.l.b16 %v678
      %v1567 = vunpack.c.l.b16 %v679
      %v1568 = vunpack.c.l.b16 %v680
      %v1569 = vunpack.c.l.b16 %v681
      %v1570 = vunpack.c.l.b16 %v682
      %v1571 = vunpack.c.l.b16 %v683
      %v1572 = vunpack.c.l.b16 %v684
      %v1573 = vunpack.c.l.b16 %v685
      %v1574 = vunpack.c.l.b16 %v686
      %v1575 = vunpack.c.l.b16 %v687
      %v1576 = vunpack.c.l.b16 %v688
      %v1577 = vunpack.c.l.b16 %v689
      %v1578 = vunpack.c.l.b16 %v690
      %v1579 = vunpack.c.l.b16 %v691
      %v1580 = vunpack.c.l.b16 %v692
      %v1581 = vunpack.c.l.b16 %v693
      %v1582 = vunpack.c.l.b16 %v694
      %v1583 = vunpack.c.l.b16 %v695
      %v1584 = vunpack.c.l.b16 %v696
      %v1585 = vunpack.c.l.b16 %v697
      %v1586 = vunpack.c.l.b16 %v698
      %v1587 = vunpack.c.l.b16 %v699
      %v1588 = vunpack.c.l.b16 %v700
      %v1589 = vunpack.c.l.b16 %v701
      %v1590 = vunpack.c.l.b16 %v702
      %v1591 = vunpack.c.l.b16 %v703
      %v1592 = vunpack.c.l.b16 %v704
      %v1593 = vunpack.c.l.b16 %v705
      %v1594 = vunpack.c.l.b16 %v706
      %v1595 = vunpack.c.l.b16 %v707
      %v1596 = vunpack.c.l.b16 %v708
      %v1597 = vunpack.c.l.b16 %v709
      %v1598 = vunpack.c.l.b16 %v710
      %v1599 = vunpack.c.l.b16 %v711
      %v1600 = vunpack.c.l.b16 %v712
      %v1601 = vunpack.c.l.b16 %v713
      %v1602 = vunpack.c.l.b16 %v714
      %v1603 = vunpack.c.l.b16 %v715
      %v1604 = vunpack.c.l.b16 %v716
      %v1605 = vunpack.c.l.b16 %v717
      %v1606 = vunpack.c.l.b16 %v718
      %v1607 = vunpack.c.l.b16 %v719
      %v1608 = vunpack.c.l.b16 %v720
      %v1609 = vunpack.c.l.b16 %v721
      %v1610 = vpack.c.b16 %v1227, %v1226
      %v1611 = vpack.c.b16 %v1229, %v1228
      %v1612 = vpack.c.b16 %v1231, %v1230
      %v1613 = vpack.c.b16 %v1233, %v1232
      %v1614 = vpack.c.b16 %v1235, %v1234
      %v1615 = vpack.c.b16 %v1237, %v1236
      %v1616 = vpack.c.b16 %v1239, %v1238
      %v1617 = vpack.c.b16 %v1241, %v1240
      %v1618 = vpack.c.b16 %v1243, %v1242
      %v1619 = vpack.c.b16 %v1245, %v1244
      %v1620 = vpack.c.b16 %v1247, %v1246
      %v1621 = vpack.c.b16 %v1249, %v1248
      %v1622 = vpack.c.b16 %v1251, %v1250
      %v1623 = vpack.c.b16 %v1253, %v1252
      %v1624 = vpack.c.b16 %v1255, %v1254
      %v1625 = vpack.c.b16 %v1257, %v1256
      %v1626 = vpack.c.b16 %v1259, %v1258
      %v1627 = vpack.c.b16 %v1261, %v1260
      %v1628 = vpack.c.b16 %v1263, %v1262
      %v1629 = vpack.c.b16 %v1265, %v1264
      %v1630 = vpack.c.b16 %v1267, %v1266
      %v1631 = vpack.c.b16 %v1269, %v1268
      %v1632 = vpack.c.b16 %v1271, %v1270
      %v1633 = vpack.c.b16 %v1273, %v1272
      %v1634 = vpack.c.b16 %v1275, %v1274
      %v1635 = vpack.c.b16 %v1277, %v1276
      %v1636 = vpack.c.b16 %v1279, %v1278
      %v1637 = vpack.c.b16 %v1281, %v1280
      %v1638 = vpack.c.b16 %v1283, %v1282
      %v1639 = vpack.c.b16 %v1285, %v1284
      %v1640 = vpack.c.b16 %v1287, %v1286
      %v1641 = vpack.c.b16 %v1289, %v1288
      %v1642 = vpack.c.b16 %v1291, %v1290
      %v1643 = vpack.c.b16 %v1293, %v1292
      %v1644 = vpack.c.b16 %v1295, %v1294
      %v1645 = vpack.c.b16 %v1297, %v1296
      %v1646 = vpack.c.b16 %v1299, %v1298
      %v1647 = vpack.c.b16 %v1301, %v1300
      %v1648 = vpack.c.b16 %v1303, %v1302
      %v1649 = vpack.c.b16 %v1305, %v1304
      %v1650 = vpack.c.b16 %v1307, %v1306
      %v1651 = vpack.c.b16 %v1309, %v1308
      %v1652 = vpack.c.b16 %v1311, %v1310
      %v1653 = vpack.c.b16 %v1313, %v1312
      %v1654 = vpack.c.b16 %v1315, %v1314
      %v1655 = vpack.c.b16 %v1317, %v1316
      %v1656 = vpack.c.b16 %v1319, %v1318
      %v1657 = vpack.c.b16 %v1321, %v1320
      %v1658 = vpack.c.b16 %v1323, %v1322
      %v1659 = vpack.c.b16 %v1325, %v1324
      %v1660 = vpack.c.b16 %v1327, %v1326
      %v1661 = vpack.c.b16 %v1329, %v1328
      %v1662 = vpack.c.b16 %v1331, %v1330
      %v1663 = vpack.c.b16 %v1333, %v1332
      %v1664 = vpack.c.b16 %v1335, %v1334
      %v1665 = vpack.c.b16 %v1337, %v1336
      %v1666 = vpack.c.b16 %v1339, %v1338
      %v1667 = vpack.c.b16 %v1341, %v1340
      %v1668 = vpack.c.b16 %v1343, %v1342
      %v1669 = vpack.c.b16 %v1345, %v1344
      %v1670 = vpack.c.b16 %v1347, %v1346
      %v1671 = vpack.c.b16 %v1349, %v1348
      %v1672 = vpack.c.b16 %v1351, %v1350
      %v1673 = vpack.c.b16 %v1353, %v1352
      %v1674 = vpack.c.b16 %v1355, %v1354
      %v1675 = vpack.c.b16 %v1357, %v1356
      %v1676 = vpack.c.b16 %v1359, %v1358
      %v1677 = vpack.c.b16 %v1361, %v1360
      %v1678 = vpack.c.b16 %v1363, %v1362
      %v1679 = vpack.c.b16 %v1365, %v1364
      %v1680 = vpack.c.b16 %v1367, %v1366
      %v1681 = vpack.c.b16 %v1369, %v1368
      %v1682 = vpack.c.b16 %v1371, %v1370
      %v1683 = vpack.c.b16 %v1373, %v1372
      %v1684 = vpack.c.b16 %v1375, %v1374
      %v1685 = vpack.c.b16 %v1377, %v1376
      %v1686 = vpack.c.b16 %v1379, %v1378
      %v1687 = vpack.c.b16 %v1381, %v1380
      %v1688 = vpack.c.b16 %v1383, %v1382
      %v1689 = vpack.c.b16 %v1385, %v1384
      %v1690 = vpack.c.b16 %v1387, %v1386
      %v1691 = vpack.c.b16 %v1389, %v1388
      %v1692 = vpack.c.b16 %v1391, %v1390
      %v1693 = vpack.c.b16 %v1393, %v1392
      %v1694 = vpack.c.b16 %v1395, %v1394
      %v1695 = vpack.c.b16 %v1397, %v1396
      %v1696 = vpack.c.b16 %v1399, %v1398
      %v1697 = vpack.c.b16 %v1401, %v1400
      %v1698 = vpack.c.b16 %v1403, %v1402
      %v1699 = vpack.c.b16 %v1405, %v1404
      %v1700 = vpack.c.b16 %v1407, %v1406
      %v1701 = vpack.c.b16 %v1409, %v1408
      %v1702 = vpack.c.b16 %v1411, %v1410
      %v1703 = vpack.c.b16 %v1413, %v1412
      %v1704 = vpack.c.b16 %v1415, %v1414
      %v1705 = vpack.c.b16 %v1417, %v1416
      %v1706 = vpack.c.b16 %v1419, %v1418
      %v1707 = vpack.c.b16 %v1421, %v1420
      %v1708 = vpack.c.b16 %v1423, %v1422
      %v1709 = vpack.c.b16 %v1425, %v1424
      %v1710 = vpack.c.b16 %v1427, %v1426
      %v1711 = vpack.c.b16 %v1429, %v1428
      %v1712 = vpack.c.b16 %v1431, %v1430
      %v1713 = vpack.c.b16 %v1433, %v1432
      %v1714 = vpack.c.b16 %v1435, %v1434
      %v1715 = vpack.c.b16 %v1437, %v1436
      %v1716 = vpack.c.b16 %v1439, %v1438
      %v1717 = vpack.c.b16 %v1441, %v1440
      %v1718 = vpack.c.b16 %v1443, %v1442
      %v1719 = vpack.c.b16 %v1445, %v1444
      %v1720 = vpack.c.b16 %v1447, %v1446
      %v1721 = vpack.c.b16 %v1449, %v1448
      %v1722 = vpack.c.b16 %v1451, %v1450
      %v1723 = vpack.c.b16 %v1453, %v1452
      %v1724 = vpack.c.b16 %v1455, %v1454
      %v1725 = vpack.c.b16 %v1457, %v1456
      %v1726 = vpack.c.b16 %v1459, %v1458
      %v1727 = vpack.c.b16 %v1461, %v1460
      %v1728 = vpack.c.b16 %v1463, %v1462
      %v1729 = vpack.c.b16 %v1465, %v1464
      %v1730 = vpack.c.b16 %v1467, %v1466
      %v1731 = vpack.c.b16 %v1469, %v1468
      %v1732 = vpack.c.b16 %v1471, %v1470
      %v1733 = vpack.c.b16 %v1473, %v1472
      %v1734 = vpack.c.b16 %v1475, %v1474
      %v1735 = vpack.c.b16 %v1477, %v1476
      %v1736 = vpack.c.b16 %v1479, %v1478
      %v1737 = vpack.c.b16 %v1481, %v1480
      %v1738 = vpack.c.b16 %v1483, %v1482
      %v1739 = vpack.c.b16 %v1485, %v1484
      %v1740 = vpack.c.b16 %v1487, %v1486
      %v1741 = vpack.c.b16 %v1489, %v1488
      %v1742 = vpack.c.b16 %v1491, %v1490
      %v1743 = vpack.c.b16 %v1493, %v1492
      %v1744 = vpack.c.b16 %v1495, %v1494
      %v1745 = vpack.c.b16 %v1497, %v1496
      %v1746 = vpack.c.b16 %v1499, %v1498
      %v1747 = vpack.c.b16 %v1501, %v1500
      %v1748 = vpack.c.b16 %v1503, %v1502
      %v1749 = vpack.c.b16 %v1505, %v1504
      %v1750 = vpack.c.b16 %v1507, %v1506
      %v1751 = vpack.c.b16 %v1509, %v1508
      %v1752 = vpack.c.b16 %v1511, %v1510
      %v1753 = vpack.c.b16 %v1513, %v1512
      %v1754 = vpack.c.b16 %v1515, %v1514
      %v1755 = vpack.c.b16 %v1517, %v1516
      %v1756 = vpack.c.b16 %v1519, %v1518
      %v1757 = vpack.c.b16 %v1521, %v1520
      %v1758 = vpack.c.b16 %v1523, %v1522
      %v1759 = vpack.c.b16 %v1525, %v1524
      %v1760 = vpack.c.b16 %v1527, %v1526
      %v1761 = vpack.c.b16 %v1529, %v1528
      %v1762 = vpack.c.b16 %v1531, %v1530
      %v1763 = vpack.c.b16 %v1533, %v1532
      %v1764 = vpack.c.b16 %v1535, %v1534
      %v1765 = vpack.c.b16 %v1537, %v1536
      %v1766 = vpack.c.b16 %v1539, %v1538
      %v1767 = vpack.c.b16 %v1541, %v1540
      %v1768 = vpack.c.b16 %v1543, %v1542
      %v1769 = vpack.c.b16 %v1545, %v1544
      %v1770 = vpack.c.b16 %v1547, %v1546
      %v1771 = vpack.c.b16 %v1549, %v1548
      %v1772 = vpack.c.b16 %v1551, %v1550
      %v1773 = vpack.c.b16 %v1553, %v1552
      %v1774 = vpack.c.b16 %v1555, %v1554
      %v1775 = vpack.c.b16 %v1557, %v1556
      %v1776 = vpack.c.b16 %v1559, %v1558
      %v1777 = vpack.c.b16 %v1561, %v1560
      %v1778 = vpack.c.b16 %v1563, %v1562
      %v1779 = vpack.c.b16 %v1565, %v1564
      %v1780 = vpack.c.b16 %v1567, %v1566
      %v1781 = vpack.c.b16 %v1569, %v1568
      %v1782 = vpack.c.b16 %v1571, %v1570
      %v1783 = vpack.c.b16 %v1573, %v1572
      %v1784 = vpack.c.b16 %v1575, %v1574
      %v1785 = vpack.c.b16 %v1577, %v1576
      %v1786 = vpack.c.b16 %v1579, %v1578
      %v1787 = vpack.c.b16 %v1581, %v1580
      %v1788 = vpack.c.b16 %v1583, %v1582
      %v1789 = vpack.c.b16 %v1585, %v1584
      %v1790 = vpack.c.b16 %v1587, %v1586
      %v1791 = vpack.c.b16 %v1589, %v1588
      %v1792 = vpack.c.b16 %v1591, %v1590
      %v1793 = vpack.c.b16 %v1593, %v1592
      %v1794 = vpack.c.b16 %v1595, %v1594
      %v1795 = vpack.c.b16 %v1597, %v1596
      %v1796 = vpack.c.b16 %v1599, %v1598
      %v1797 = vpack.c.b16 %v1601, %v1600
      %v1798 = vpack.c.b16 %v1603, %v1602
      %v1799 = vpack.c.b16 %v1605, %v1604
      %v1800 = vpack.c.b16 %v1607, %v1606
      %v1801 = vpack.c.b16 %v1609, %v1608
      %1994 = vmatprep.subr.bf16.mxu0 0
      %1995 = vmatpush1.bf16.msra.mxu0 %v1610
      %1996 = vmatprep.subr.bf16.mxu0 0
      %1997 = vmatpush1.bf16.msra.mxu0 %v1611
      %1998 = vmatprep.subr.bf16.mxu0 0
      %1999 = vmatpush1.bf16.msra.mxu0 %v1612
      %2000 = vmatprep.subr.bf16.mxu0 0
      %2001 = vmatpush1.bf16.msra.mxu0 %v1613
      %2002 = vmatprep.subr.bf16.mxu0 0
      %2003 = vmatpush1.bf16.msra.mxu0 %v1614
      %2004 = vmatprep.subr.bf16.mxu0 0
      %2005 = vmatpush1.bf16.msra.mxu0 %v1615
      %2006 = vmatprep.subr.bf16.mxu0 0
      %2007 = vmatpush1.bf16.msra.mxu0 %v1616
      %2008 = vmatprep.subr.bf16.mxu0 0
      %2009 = vmatpush1.bf16.msra.mxu0 %v1617
      %2010 = vmatprep.subr.bf16.mxu0 0
      %2011 = vmatpush1.bf16.msra.mxu0 %v1618
      %2012 = vmatprep.subr.bf16.mxu0 0
      %2013 = vmatpush1.bf16.msra.mxu0 %v1619
      %2014 = vmatprep.subr.bf16.mxu0 0
      %2015 = vmatpush1.bf16.msra.mxu0 %v1620
      %2016 = vmatprep.subr.bf16.mxu0 0
      %2017 = vmatpush1.bf16.msra.mxu0 %v1621
      %2018 = vmatprep.subr.bf16.mxu0 0
      %2019 = vmatpush1.bf16.msra.mxu0 %v1622
      %2020 = vmatprep.subr.bf16.mxu0 0
      %2021 = vmatpush1.bf16.msra.mxu0 %v1623
      %2022 = vmatprep.subr.bf16.mxu0 0
      %2023 = vmatpush1.bf16.msra.mxu0 %v1624
      %2024 = vmatprep.subr.bf16.mxu0 0
      %2025 = vmatpush1.bf16.msra.mxu0 %v1625
      %2026 = vmatprep.mubr.bf16.mxu0 %v795
      %2027 = vmatmul.mubr.bf16.gmra.mrb[0].mxu0 %v794
      %v2028 = vpop.f32.mrb[0].mxu0
      %v2029 = vadd.f32 0.0, %v2028
      %v2030 = vpop.f32.mrb[0].mxu0
      %v2031 = vpop.f32.mrb[0].mxu0
      %v2032 = vadd.f32 0.0, %v2031
      %v2033 = vpop.f32.mrb[0].mxu0
      %2034 = vdwg.mxu0
      %2035 = vmatprep.subr.bf16.mxu0 0
      %2036 = vmatpush1.bf16.msra.mxu0 %v1626
      %2037 = vmatprep.subr.bf16.mxu0 0
      %2038 = vmatpush1.bf16.msra.mxu0 %v1627
      %2039 = vmatprep.subr.bf16.mxu0 0
      %2040 = vmatpush1.bf16.msra.mxu0 %v1628
      %2041 = vmatprep.subr.bf16.mxu0 0
      %2042 = vmatpush1.bf16.msra.mxu0 %v1629
      %2043 = vmatprep.subr.bf16.mxu0 0
      %2044 = vmatpush1.bf16.msra.mxu0 %v1630
      %2045 = vmatprep.subr.bf16.mxu0 0
      %2046 = vmatpush1.bf16.msra.mxu0 %v1631
      %2047 = vmatprep.subr.bf16.mxu0 0
      %2048 = vmatpush1.bf16.msra.mxu0 %v1632
      %2049 = vmatprep.subr.bf16.mxu0 0
      %2050 = vmatpush1.bf16.msra.mxu0 %v1633
      %2051 = vmatprep.subr.bf16.mxu0 0
      %2052 = vmatpush1.bf16.msra.mxu0 %v1634
      %2053 = vmatprep.subr.bf16.mxu0 0
      %2054 = vmatpush1.bf16.msra.mxu0 %v1635
      %2055 = vmatprep.subr.bf16.mxu0 0
      %2056 = vmatpush1.bf16.msra.mxu0 %v1636
      %2057 = vmatprep.subr.bf16.mxu0 0
      %2058 = vmatpush1.bf16.msra.mxu0 %v1637
      %2059 = vmatprep.subr.bf16.mxu0 0
      %2060 = vmatpush1.bf16.msra.mxu0 %v1638
      %2061 = vmatprep.subr.bf16.mxu0 0
      %2062 = vmatpush1.bf16.msra.mxu0 %v1639
      %2063 = vmatprep.subr.bf16.mxu0 0
      %2064 = vmatpush1.bf16.msra.mxu0 %v1640
      %2065 = vmatprep.subr.bf16.mxu0 0
      %2066 = vmatpush1.bf16.msra.mxu0 %v1641
      %2067 = vmatprep.mubr.bf16.mxu0 %v797
      %2068 = vmatmul.mubr.bf16.gmra.mrb[0].mxu0 %v796
      %v2069 = vpop.f32.mrb[0].mxu0
      %v2070 = vadd.f32 %v2029, %v2069
      %v2071 = vpop.f32.mrb[0].mxu0
      %v2072 = vpop.f32.mrb[0].mxu0
      %v2073 = vadd.f32 %v2032, %v2072
      %v2074 = vpop.f32.mrb[0].mxu0
      %2075 = vdwg.mxu0
      %2076 = vmatprep.subr.bf16.mxu0 0
      %2077 = vmatpush1.bf16.msra.mxu0 %v1642
      %2078 = vmatprep.subr.bf16.mxu0 0
      %2079 = vmatpush1.bf16.msra.mxu0 %v1643
      %2080 = vmatprep.subr.bf16.mxu0 0
      %2081 = vmatpush1.bf16.msra.mxu0 %v1644
      %2082 = vmatprep.subr.bf16.mxu0 0
      %2083 = vmatpush1.bf16.msra.mxu0 %v1645
      %2084 = vmatprep.subr.bf16.mxu0 0
      %2085 = vmatpush1.bf16.msra.mxu0 %v1646
      %2086 = vmatprep.subr.bf16.mxu0 0
      %2087 = vmatpush1.bf16.msra.mxu0 %v1647
      %2088 = vmatprep.subr.bf16.mxu0 0
      %2089 = vmatpush1.bf16.msra.mxu0 %v1648
      %2090 = vmatprep.subr.bf16.mxu0 0
      %2091 = vmatpush1.bf16.msra.mxu0 %v1649
      %2092 = vmatprep.subr.bf16.mxu0 0
      %2093 = vmatpush1.bf16.msra.mxu0 %v1650
      %2094 = vmatprep.subr.bf16.mxu0 0
      %2095 = vmatpush1.bf16.msra.mxu0 %v1651
      %2096 = vmatprep.subr.bf16.mxu0 0
      %2097 = vmatpush1.bf16.msra.mxu0 %v1652
      %2098 = vmatprep.subr.bf16.mxu0 0
      %2099 = vmatpush1.bf16.msra.mxu0 %v1653
      %2100 = vmatprep.subr.bf16.mxu0 0
      %2101 = vmatpush1.bf16.msra.mxu0 %v1654
      %2102 = vmatprep.subr.bf16.mxu0 0
      %2103 = vmatpush1.bf16.msra.mxu0 %v1655
      %2104 = vmatprep.subr.bf16.mxu0 0
      %2105 = vmatpush1.bf16.msra.mxu0 %v1656
      %2106 = vmatprep.subr.bf16.mxu0 0
      %2107 = vmatpush1.bf16.msra.mxu0 %v1657
      %2108 = vmatprep.mubr.bf16.mxu0 %v799
      %2109 = vmatmul.mubr.bf16.gmra.mrb[0].mxu0 %v798
      %v2110 = vpop.f32.mrb[0].mxu0
      %v2111 = vadd.f32 %v2070, %v2110
      %v2112 = vpop.f32.mrb[0].mxu0
      %v2113 = vpop.f32.mrb[0].mxu0
      %v2114 = vadd.f32 %v2073, %v2113
      %v2115 = vpop.f32.mrb[0].mxu0
      %2116 = vdwg.mxu0
      %2117 = vmatprep.subr.bf16.mxu0 0
      %2118 = vmatpush1.bf16.msra.mxu0 %v1658
      %2119 = vmatprep.subr.bf16.mxu0 0
      %2120 = vmatpush1.bf16.msra.mxu0 %v1659
      %2121 = vmatprep.subr.bf16.mxu0 0
      %2122 = vmatpush1.bf16.msra.mxu0 %v1660
      %2123 = vmatprep.subr.bf16.mxu0 0
      %2124 = vmatpush1.bf16.msra.mxu0 %v1661
      %2125 = vmatprep.subr.bf16.mxu0 0
      %2126 = vmatpush1.bf16.msra.mxu0 %v1662
      %2127 = vmatprep.subr.bf16.mxu0 0
      %2128 = vmatpush1.bf16.msra.mxu0 %v1663
      %2129 = vmatprep.subr.bf16.mxu0 0
      %2130 = vmatpush1.bf16.msra.mxu0 %v1664
      %2131 = vmatprep.subr.bf16.mxu0 0
      %2132 = vmatpush1.bf16.msra.mxu0 %v1665
      %2133 = vmatprep.subr.bf16.mxu0 0
      %2134 = vmatpush1.bf16.msra.mxu0 %v1666
      %2135 = vmatprep.subr.bf16.mxu0 0
      %2136 = vmatpush1.bf16.msra.mxu0 %v1667
      %2137 = vmatprep.subr.bf16.mxu0 0
      %2138 = vmatpush1.bf16.msra.mxu0 %v1668
      %2139 = vmatprep.subr.bf16.mxu0 0
      %2140 = vmatpush1.bf16.msra.mxu0 %v1669
      %2141 = vmatprep.subr.bf16.mxu0 0
      %2142 = vmatpush1.bf16.msra.mxu0 %v1670
      %2143 = vmatprep.subr.bf16.mxu0 0
      %2144 = vmatpush1.bf16.msra.mxu0 %v1671
      %2145 = vmatprep.subr.bf16.mxu0 0
      %2146 = vmatpush1.bf16.msra.mxu0 %v1672
      %2147 = vmatprep.subr.bf16.mxu0 0
      %2148 = vmatpush1.bf16.msra.mxu0 %v1673
      %2149 = vmatprep.mubr.bf16.mxu0 %v801
      %2150 = vmatmul.mubr.bf16.gmra.mrb[0].mxu0 %v800
      %v2151 = vpop.f32.mrb[0].mxu0
      %v2152 = vadd.f32 %v2111, %v2151
      %v2153 = vpop.f32.mrb[0].mxu0
      %v2154 = vpop.f32.mrb[0].mxu0
      %v2155 = vadd.f32 %v2114, %v2154
      %v2156 = vpop.f32.mrb[0].mxu0
      %2157 = vdwg.mxu0
      %2158 = vmatprep.subr.bf16.mxu0 0
      %2159 = vmatpush1.bf16.msra.mxu0 %v1674
      %2160 = vmatprep.subr.bf16.mxu0 0
      %2161 = vmatpush1.bf16.msra.mxu0 %v1675
      %2162 = vmatprep.subr.bf16.mxu0 0
      %2163 = vmatpush1.bf16.msra.mxu0 %v1676
      %2164 = vmatprep.subr.bf16.mxu0 0
      %2165 = vmatpush1.bf16.msra.mxu0 %v1677
      %2166 = vmatprep.subr.bf16.mxu0 0
      %2167 = vmatpush1.bf16.msra.mxu0 %v1678
      %2168 = vmatprep.subr.bf16.mxu0 0
      %2169 = vmatpush1.bf16.msra.mxu0 %v1679
      %2170 = vmatprep.subr.bf16.mxu0 0
      %2171 = vmatpush1.bf16.msra.mxu0 %v1680
      %2172 = vmatprep.subr.bf16.mxu0 0
      %2173 = vmatpush1.bf16.msra.mxu0 %v1681
      %2174 = vmatprep.subr.bf16.mxu0 0
      %2175 = vmatpush1.bf16.msra.mxu0 %v1682
      %2176 = vmatprep.subr.bf16.mxu0 0
      %2177 = vmatpush1.bf16.msra.mxu0 %v1683
      %2178 = vmatprep.subr.bf16.mxu0 0
      %2179 = vmatpush1.bf16.msra.mxu0 %v1684
      %2180 = vmatprep.subr.bf16.mxu0 0
      %2181 = vmatpush1.bf16.msra.mxu0 %v1685
      %2182 = vmatprep.subr.bf16.mxu0 0
      %2183 = vmatpush1.bf16.msra.mxu0 %v1686
      %2184 = vmatprep.subr.bf16.mxu0 0
      %2185 = vmatpush1.bf16.msra.mxu0 %v1687
      %2186 = vmatprep.subr.bf16.mxu0 0
      %2187 = vmatpush1.bf16.msra.mxu0 %v1688
      %2188 = vmatprep.subr.bf16.mxu0 0
      %2189 = vmatpush1.bf16.msra.mxu0 %v1689
      %2190 = vmatprep.mubr.bf16.mxu0 %v803
      %2191 = vmatmul.mubr.bf16.gmra.mrb[0].mxu0 %v802
      %v2192 = vpop.f32.mrb[0].mxu0
      %v2193 = vadd.f32 %v2152, %v2192
      %v2194 = vpop.f32.mrb[0].mxu0
      %v2195 = vpop.f32.mrb[0].mxu0
      %v2196 = vadd.f32 %v2155, %v2195
      %v2197 = vpop.f32.mrb[0].mxu0
      %2198 = vdwg.mxu0
      %2199 = vmatprep.subr.bf16.mxu0 0
      %2200 = vmatpush1.bf16.msra.mxu0 %v1690
      %2201 = vmatprep.subr.bf16.mxu0 0
      %2202 = vmatpush1.bf16.msra.mxu0 %v1691
      %2203 = vmatprep.subr.bf16.mxu0 0
      %2204 = vmatpush1.bf16.msra.mxu0 %v1692
      %2205 = vmatprep.subr.bf16.mxu0 0
      %2206 = vmatpush1.bf16.msra.mxu0 %v1693
      %2207 = vmatprep.subr.bf16.mxu0 0
      %2208 = vmatpush1.bf16.msra.mxu0 %v1694
      %2209 = vmatprep.subr.bf16.mxu0 0
      %2210 = vmatpush1.bf16.msra.mxu0 %v1695
      %2211 = vmatprep.subr.bf16.mxu0 0
      %2212 = vmatpush1.bf16.msra.mxu0 %v1696
      %2213 = vmatprep.subr.bf16.mxu0 0
      %2214 = vmatpush1.bf16.msra.mxu0 %v1697
      %2215 = vmatprep.subr.bf16.mxu0 0
      %2216 = vmatpush1.bf16.msra.mxu0 %v1698
      %2217 = vmatprep.subr.bf16.mxu0 0
      %2218 = vmatpush1.bf16.msra.mxu0 %v1699
      %2219 = vmatprep.subr.bf16.mxu0 0
      %2220 = vmatpush1.bf16.msra.mxu0 %v1700
      %2221 = vmatprep.subr.bf16.mxu0 0
      %2222 = vmatpush1.bf16.msra.mxu0 %v1701
      %2223 = vmatprep.subr.bf16.mxu0 0
      %2224 = vmatpush1.bf16.msra.mxu0 %v1702
      %2225 = vmatprep.subr.bf16.mxu0 0
      %2226 = vmatpush1.bf16.msra.mxu0 %v1703
      %2227 = vmatprep.subr.bf16.mxu0 0
      %2228 = vmatpush1.bf16.msra.mxu0 %v1704
      %2229 = vmatprep.subr.bf16.mxu0 0
      %2230 = vmatpush1.bf16.msra.mxu0 %v1705
      %2231 = vmatprep.mubr.bf16.mxu0 %v805
      %2232 = vmatmul.mubr.bf16.gmra.mrb[0].mxu0 %v804
      %v2233 = vpop.f32.mrb[0].mxu0
      %v2234 = vadd.f32 %v2193, %v2233
      %v2235 = vpop.f32.mrb[0].mxu0
      %v2236 = vpop.f32.mrb[0].mxu0
      %v2237 = vadd.f32 %v2196, %v2236
      %v2238 = vpop.f32.mrb[0].mxu0
      %2239 = vdwg.mxu0
      %2240 = vmatprep.subr.bf16.mxu0 0
      %2241 = vmatpush1.bf16.msra.mxu0 %v1706
      %2242 = vmatprep.subr.bf16.mxu0 0
      %2243 = vmatpush1.bf16.msra.mxu0 %v1707
      %2244 = vmatprep.subr.bf16.mxu0 0
      %2245 = vmatpush1.bf16.msra.mxu0 %v1708
      %2246 = vmatprep.subr.bf16.mxu0 0
      %2247 = vmatpush1.bf16.msra.mxu0 %v1709
      %2248 = vmatprep.subr.bf16.mxu0 0
      %2249 = vmatpush1.bf16.msra.mxu0 %v1710
      %2250 = vmatprep.subr.bf16.mxu0 0
      %2251 = vmatpush1.bf16.msra.mxu0 %v1711
      %2252 = vmatprep.subr.bf16.mxu0 0
      %2253 = vmatpush1.bf16.msra.mxu0 %v1712
      %2254 = vmatprep.subr.bf16.mxu0 0
      %2255 = vmatpush1.bf16.msra.mxu0 %v1713
      %2256 = vmatprep.subr.bf16.mxu0 0
      %2257 = vmatpush1.bf16.msra.mxu0 %v1714
      %2258 = vmatprep.subr.bf16.mxu0 0
      %2259 = vmatpush1.bf16.msra.mxu0 %v1715
      %2260 = vmatprep.subr.bf16.mxu0 0
      %2261 = vmatpush1.bf16.msra.mxu0 %v1716
      %2262 = vmatprep.subr.bf16.mxu0 0
      %2263 = vmatpush1.bf16.msra.mxu0 %v1717
      %2264 = vmatprep.subr.bf16.mxu0 0
      %2265 = vmatpush1.bf16.msra.mxu0 %v1718
      %2266 = vmatprep.subr.bf16.mxu0 0
      %2267 = vmatpush1.bf16.msra.mxu0 %v1719
      %2268 = vmatprep.subr.bf16.mxu0 0
      %2269 = vmatpush1.bf16.msra.mxu0 %v1720
      %2270 = vmatprep.subr.bf16.mxu0 0
      %2271 = vmatpush1.bf16.msra.mxu0 %v1721
      %2272 = vmatprep.mubr.bf16.mxu0 %v807
      %2273 = vmatmul.mubr.bf16.gmra.mrb[0].mxu0 %v806
      %v2274 = vpop.f32.mrb[0].mxu0
      %v2275 = vadd.f32 %v2234, %v2274
      %v2276 = vpop.f32.mrb[0].mxu0
      %v2277 = vpop.f32.mrb[0].mxu0
      %v2278 = vadd.f32 %v2237, %v2277
      %v2279 = vpop.f32.mrb[0].mxu0
      %2280 = vdwg.mxu0
      %2281 = vmatprep.subr.bf16.mxu0 0
      %2282 = vmatpush1.bf16.msra.mxu0 %v1722
      %2283 = vmatprep.subr.bf16.mxu0 0
      %2284 = vmatpush1.bf16.msra.mxu0 %v1723
      %2285 = vmatprep.subr.bf16.mxu0 0
      %2286 = vmatpush1.bf16.msra.mxu0 %v1724
      %2287 = vmatprep.subr.bf16.mxu0 0
      %2288 = vmatpush1.bf16.msra.mxu0 %v1725
      %2289 = vmatprep.subr.bf16.mxu0 0
      %2290 = vmatpush1.bf16.msra.mxu0 %v1726
      %2291 = vmatprep.subr.bf16.mxu0 0
      %2292 = vmatpush1.bf16.msra.mxu0 %v1727
      %2293 = vmatprep.subr.bf16.mxu0 0
      %2294 = vmatpush1.bf16.msra.mxu0 %v1728
      %2295 = vmatprep.subr.bf16.mxu0 0
      %2296 = vmatpush1.bf16.msra.mxu0 %v1729
      %2297 = vmatprep.subr.bf16.mxu0 0
      %2298 = vmatpush1.bf16.msra.mxu0 %v1730
      %2299 = vmatprep.subr.bf16.mxu0 0
      %2300 = vmatpush1.bf16.msra.mxu0 %v1731
      %2301 = vmatprep.subr.bf16.mxu0 0
      %2302 = vmatpush1.bf16.msra.mxu0 %v1732
      %2303 = vmatprep.subr.bf16.mxu0 0
      %2304 = vmatpush1.bf16.msra.mxu0 %v1733
      %2305 = vmatprep.subr.bf16.mxu0 0
      %2306 = vmatpush1.bf16.msra.mxu0 %v1734
      %2307 = vmatprep.subr.bf16.mxu0 0
      %2308 = vmatpush1.bf16.msra.mxu0 %v1735
      %2309 = vmatprep.subr.bf16.mxu0 0
      %2310 = vmatpush1.bf16.msra.mxu0 %v1736
      %2311 = vmatprep.subr.bf16.mxu0 0
      %2312 = vmatpush1.bf16.msra.mxu0 %v1737
      %2313 = vmatprep.mubr.bf16.mxu0 %v809
      %2314 = vmatmul.mubr.bf16.gmra.mrb[0].mxu0 %v808
      %v2315 = vpop.f32.mrb[0].mxu0
      %v2316 = vadd.f32 %v2275, %v2315
      %v2317 = vpop.f32.mrb[0].mxu0
      %v2318 = vpop.f32.mrb[0].mxu0
      %v2319 = vadd.f32 %v2278, %v2318
      %v2320 = vpop.f32.mrb[0].mxu0
      %2321 = vdwg.mxu0
      %2322 = vmatprep.subr.bf16.mxu0 0
      %2323 = vmatpush1.bf16.msra.mxu0 %v1738
      %2324 = vmatprep.subr.bf16.mxu0 0
      %2325 = vmatpush1.bf16.msra.mxu0 %v1739
      %2326 = vmatprep.subr.bf16.mxu0 0
      %2327 = vmatpush1.bf16.msra.mxu0 %v1740
      %2328 = vmatprep.subr.bf16.mxu0 0
      %2329 = vmatpush1.bf16.msra.mxu0 %v1741
      %2330 = vmatprep.subr.bf16.mxu0 0
      %2331 = vmatpush1.bf16.msra.mxu0 %v1742
      %2332 = vmatprep.subr.bf16.mxu0 0
      %2333 = vmatpush1.bf16.msra.mxu0 %v1743
      %2334 = vmatprep.subr.bf16.mxu0 0
      %2335 = vmatpush1.bf16.msra.mxu0 %v1744
      %2336 = vmatprep.subr.bf16.mxu0 0
      %2337 = vmatpush1.bf16.msra.mxu0 %v1745
      %2338 = vmatprep.subr.bf16.mxu0 0
      %2339 = vmatpush1.bf16.msra.mxu0 %v1746
      %2340 = vmatprep.subr.bf16.mxu0 0
      %2341 = vmatpush1.bf16.msra.mxu0 %v1747
      %2342 = vmatprep.subr.bf16.mxu0 0
      %2343 = vmatpush1.bf16.msra.mxu0 %v1748
      %2344 = vmatprep.subr.bf16.mxu0 0
      %2345 = vmatpush1.bf16.msra.mxu0 %v1749
      %2346 = vmatprep.subr.bf16.mxu0 0
      %2347 = vmatpush1.bf16.msra.mxu0 %v1750
      %2348 = vmatprep.subr.bf16.mxu0 0
      %2349 = vmatpush1.bf16.msra.mxu0 %v1751
      %2350 = vmatprep.subr.bf16.mxu0 0
      %2351 = vmatpush1.bf16.msra.mxu0 %v1752
      %2352 = vmatprep.subr.bf16.mxu0 0
      %2353 = vmatpush1.bf16.msra.mxu0 %v1753
      %2354 = vmatprep.mubr.bf16.mxu0 %v811
      %2355 = vmatmul.mubr.bf16.gmra.mrb[0].mxu0 %v810
      %v2356 = vpop.f32.mrb[0].mxu0
      %v2357 = vadd.f32 %v2316, %v2356
      %v2358 = vpop.f32.mrb[0].mxu0
      %v2359 = vpop.f32.mrb[0].mxu0
      %v2360 = vadd.f32 %v2319, %v2359
      %v2361 = vpop.f32.mrb[0].mxu0
      %2362 = vdwg.mxu0
      %2363 = vmatprep.subr.bf16.mxu0 0
      %2364 = vmatpush1.bf16.msra.mxu0 %v1754
      %2365 = vmatprep.subr.bf16.mxu0 0
      %2366 = vmatpush1.bf16.msra.mxu0 %v1755
      %2367 = vmatprep.subr.bf16.mxu0 0
      %2368 = vmatpush1.bf16.msra.mxu0 %v1756
      %2369 = vmatprep.subr.bf16.mxu0 0
      %2370 = vmatpush1.bf16.msra.mxu0 %v1757
      %2371 = vmatprep.subr.bf16.mxu0 0
      %2372 = vmatpush1.bf16.msra.mxu0 %v1758
      %2373 = vmatprep.subr.bf16.mxu0 0
      %2374 = vmatpush1.bf16.msra.mxu0 %v1759
      %2375 = vmatprep.subr.bf16.mxu0 0
      %2376 = vmatpush1.bf16.msra.mxu0 %v1760
      %2377 = vmatprep.subr.bf16.mxu0 0
      %2378 = vmatpush1.bf16.msra.mxu0 %v1761
      %2379 = vmatprep.subr.bf16.mxu0 0
      %2380 = vmatpush1.bf16.msra.mxu0 %v1762
      %2381 = vmatprep.subr.bf16.mxu0 0
      %2382 = vmatpush1.bf16.msra.mxu0 %v1763
      %2383 = vmatprep.subr.bf16.mxu0 0
      %2384 = vmatpush1.bf16.msra.mxu0 %v1764
      %2385 = vmatprep.subr.bf16.mxu0 0
      %2386 = vmatpush1.bf16.msra.mxu0 %v1765
      %2387 = vmatprep.subr.bf16.mxu0 0
      %2388 = vmatpush1.bf16.msra.mxu0 %v1766
      %2389 = vmatprep.subr.bf16.mxu0 0
      %2390 = vmatpush1.bf16.msra.mxu0 %v1767
      %2391 = vmatprep.subr.bf16.mxu0 0
      %2392 = vmatpush1.bf16.msra.mxu0 %v1768
      %2393 = vmatprep.subr.bf16.mxu0 0
      %2394 = vmatpush1.bf16.msra.mxu0 %v1769
      %2395 = vmatprep.mubr.bf16.mxu0 %v813
      %2396 = vmatmul.mubr.bf16.gmra.mrb[0].mxu0 %v812
      %v2397 = vpop.f32.mrb[0].mxu0
      %v2398 = vadd.f32 %v2357, %v2397
      %v2399 = vpop.f32.mrb[0].mxu0
      %v2400 = vpop.f32.mrb[0].mxu0
      %v2401 = vadd.f32 %v2360, %v2400
      %v2402 = vpop.f32.mrb[0].mxu0
      %2403 = vdwg.mxu0
      %2404 = vmatprep.subr.bf16.mxu0 0
      %2405 = vmatpush1.bf16.msra.mxu0 %v1770
      %2406 = vmatprep.subr.bf16.mxu0 0
      %2407 = vmatpush1.bf16.msra.mxu0 %v1771
      %2408 = vmatprep.subr.bf16.mxu0 0
      %2409 = vmatpush1.bf16.msra.mxu0 %v1772
      %2410 = vmatprep.subr.bf16.mxu0 0
      %2411 = vmatpush1.bf16.msra.mxu0 %v1773
      %2412 = vmatprep.subr.bf16.mxu0 0
      %2413 = vmatpush1.bf16.msra.mxu0 %v1774
      %2414 = vmatprep.subr.bf16.mxu0 0
      %2415 = vmatpush1.bf16.msra.mxu0 %v1775
      %2416 = vmatprep.subr.bf16.mxu0 0
      %2417 = vmatpush1.bf16.msra.mxu0 %v1776
      %2418 = vmatprep.subr.bf16.mxu0 0
      %2419 = vmatpush1.bf16.msra.mxu0 %v1777
      %2420 = vmatprep.subr.bf16.mxu0 0
      %2421 = vmatpush1.bf16.msra.mxu0 %v1778
      %2422 = vmatprep.subr.bf16.mxu0 0
      %2423 = vmatpush1.bf16.msra.mxu0 %v1779
      %2424 = vmatprep.subr.bf16.mxu0 0
      %2425 = vmatpush1.bf16.msra.mxu0 %v1780
      %2426 = vmatprep.subr.bf16.mxu0 0
      %2427 = vmatpush1.bf16.msra.mxu0 %v1781
      %2428 = vmatprep.subr.bf16.mxu0 0
      %2429 = vmatpush1.bf16.msra.mxu0 %v1782
      %2430 = vmatprep.subr.bf16.mxu0 0
      %2431 = vmatpush1.bf16.msra.mxu0 %v1783
      %2432 = vmatprep.subr.bf16.mxu0 0
      %2433 = vmatpush1.bf16.msra.mxu0 %v1784
      %2434 = vmatprep.subr.bf16.mxu0 0
      %2435 = vmatpush1.bf16.msra.mxu0 %v1785
      %2436 = vmatprep.mubr.bf16.mxu0 %v815
      %2437 = vmatmul.mubr.bf16.gmra.mrb[0].mxu0 %v814
      %v2438 = vpop.f32.mrb[0].mxu0
      %v2439 = vadd.f32 %v2398, %v2438
      %v2440 = vpop.f32.mrb[0].mxu0
      %v2441 = vpop.f32.mrb[0].mxu0
      %v2442 = vadd.f32 %v2401, %v2441
      %v2443 = vpop.f32.mrb[0].mxu0
      %2444 = vdwg.mxu0
      %2445 = vmatprep.subr.bf16.mxu0 0
      %2446 = vmatpush1.bf16.msra.mxu0 %v1786
      %2447 = vmatprep.subr.bf16.mxu0 0
      %2448 = vmatpush1.bf16.msra.mxu0 %v1787
      %2449 = vmatprep.subr.bf16.mxu0 0
      %2450 = vmatpush1.bf16.msra.mxu0 %v1788
      %2451 = vmatprep.subr.bf16.mxu0 0
      %2452 = vmatpush1.bf16.msra.mxu0 %v1789
      %2453 = vmatprep.subr.bf16.mxu0 0
      %2454 = vmatpush1.bf16.msra.mxu0 %v1790
      %2455 = vmatprep.subr.bf16.mxu0 0
      %2456 = vmatpush1.bf16.msra.mxu0 %v1791
      %2457 = vmatprep.subr.bf16.mxu0 0
      %2458 = vmatpush1.bf16.msra.mxu0 %v1792
      %2459 = vmatprep.subr.bf16.mxu0 0
      %2460 = vmatpush1.bf16.msra.mxu0 %v1793
      %2461 = vmatprep.subr.bf16.mxu0 0
      %2462 = vmatpush1.bf16.msra.mxu0 %v1794
      %2463 = vmatprep.subr.bf16.mxu0 0
      %2464 = vmatpush1.bf16.msra.mxu0 %v1795
      %2465 = vmatprep.subr.bf16.mxu0 0
      %2466 = vmatpush1.bf16.msra.mxu0 %v1796
      %2467 = vmatprep.subr.bf16.mxu0 0
      %2468 = vmatpush1.bf16.msra.mxu0 %v1797
      %2469 = vmatprep.subr.bf16.mxu0 0
      %2470 = vmatpush1.bf16.msra.mxu0 %v1798
      %2471 = vmatprep.subr.bf16.mxu0 0
      %2472 = vmatpush1.bf16.msra.mxu0 %v1799
      %2473 = vmatprep.subr.bf16.mxu0 0
      %2474 = vmatpush1.bf16.msra.mxu0 %v1800
      %2475 = vmatprep.subr.bf16.mxu0 0
      %2476 = vmatpush1.bf16.msra.mxu0 %v1801
      %2477 = vmatprep.mubr.bf16.mxu0 %v817
      %2478 = vmatmul.mubr.bf16.gmra.mrb[0].mxu0 %v816
      %v2479 = vpop.f32.mrb[0].mxu0
      %v2480 = vadd.f32 %v2439, %v2479
      %v2481 = vpop.f32.mrb[0].mxu0
      %v2482 = vpop.f32.mrb[0].mxu0
      %v2483 = vadd.f32 %v2442, %v2482
      %v2484 = vpop.f32.mrb[0].mxu0
      %2485 = vdwg.mxu0
      %v2486 = vadd.f32 %v312, %v2480
      %v2487 = vadd.f32 %v313, %v2483
      %2488 = vst [vmem:[#allocation2] sm:$0xff] %v2486
      %2489 = vst [vmem:[#allocation2 + $0x8] sm:$0xff] %v2487
      // Predicated region
      $region45: #{vidtext_forward.1} parent=39 // pred_check
        %p2490 = pneg %p306
      $region46: #{vidtext_forward.1} parent=39 // pred_check_branch
        %2492 = sbr.rel (%p2490) target = $region48
      $region47: #{vidtext_forward.1} parent=39 // pred_region
        %v2493 = vld [vmem:[#allocation2] sm:$0xff]
        %v2494 = vld [vmem:[#allocation2 + $0x8] sm:$0xff]
        %v2495 = vpack.c.bf16 %v2494, %v2493
        %v2496 = vld [vmem:[%s290] sm:$0xf]
        %v2497 = vld [vmem:[%s290 + $0x4] sm:$0xf]
        %v2498 = vmax.bf16 %v2496, 0
        %v2499 = vmax.bf16 %v2497, 0
        %v2502 = vunpack.c.l.b16 %v2498
        %v2503 = vunpack.c.l.b16 %v2499
        %v2504 = vpack.c.b16 %v2503, %v2502
        %v2506 = vld [vmem:[%s3] sm:$0xff]
        %v2507 = vld [vmem:[%s3 + $0x8] sm:$0xff]
        %v2508 = vld [vmem:[%s3 + $0x10] sm:$0xff]
        %v2509 = vld [vmem:[%s3 + $0x18] sm:$0xff]
        %v2510 = vld [vmem:[%s3 + $0x20] sm:$0xff]
        %v2511 = vld [vmem:[%s3 + $0x28] sm:$0xff]
        %v2512 = vld [vmem:[%s3 + $0x30] sm:$0xff]
        %v2513 = vld [vmem:[%s3 + $0x38] sm:$0xff]
        %v2514 = vld [vmem:[%s3 + $0x40] sm:$0xff]
        %v2515 = vld [vmem:[%s3 + $0x48] sm:$0xff]
        %v2516 = vld [vmem:[%s3 + $0x50] sm:$0xff]
        %v2517 = vld [vmem:[%s3 + $0x58] sm:$0xff]
        %v2518 = vld [vmem:[%s3 + $0x60] sm:$0xff]
        %v2519 = vld [vmem:[%s3 + $0x68] sm:$0xff]
        %v2520 = vld [vmem:[%s3 + $0x70] sm:$0xff]
        %v2521 = vld [vmem:[%s3 + $0x78] sm:$0xff]
        %v2522 = vld [vmem:[%s3 + $0x80] sm:$0xff]
        %v2523 = vld [vmem:[%s3 + $0x88] sm:$0xff]
        %v2524 = vld [vmem:[%s3 + $0x90] sm:$0xff]
        %v2525 = vld [vmem:[%s3 + $0x98] sm:$0xff]
        %v2526 = vld [vmem:[%s3 + $0xa0] sm:$0xff]
        %v2527 = vld [vmem:[%s3 + $0xa8] sm:$0xff]
        %v2528 = vld [vmem:[%s3 + $0xb0] sm:$0xff]
        %v2529 = vld [vmem:[%s3 + $0xb8] sm:$0xff]
        %v2530 = vld [vmem:[%s3 + $0xc0] sm:$0xff]
        %v2531 = vld [vmem:[%s3 + $0xc8] sm:$0xff]
        %v2532 = vld [vmem:[%s3 + $0xd0] sm:$0xff]
        %v2533 = vld [vmem:[%s3 + $0xd8] sm:$0xff]
        %v2534 = vld [vmem:[%s3 + $0xe0] sm:$0xff]
        %v2535 = vld [vmem:[%s3 + $0xe8] sm:$0xff]
        %v2536 = vld [vmem:[%s3 + $0xf0] sm:$0xff]
        %v2537 = vld [vmem:[%s3 + $0xf8] sm:$0xff]
        %v2538 = vld [vmem:[%s3 + $0x100] sm:$0xff]
        %v2539 = vld [vmem:[%s3 + $0x108] sm:$0xff]
        %v2540 = vld [vmem:[%s3 + $0x110] sm:$0xff]
        %v2541 = vld [vmem:[%s3 + $0x118] sm:$0xff]
        %v2542 = vld [vmem:[%s3 + $0x120] sm:$0xff]
        %v2543 = vld [vmem:[%s3 + $0x128] sm:$0xff]
        %v2544 = vld [vmem:[%s3 + $0x130] sm:$0xff]
        %v2545 = vld [vmem:[%s3 + $0x138] sm:$0xff]
        %v2546 = vld [vmem:[%s3 + $0x140] sm:$0xff]
        %v2547 = vld [vmem:[%s3 + $0x148] sm:$0xff]
        %v2548 = vld [vmem:[%s3 + $0x150] sm:$0xff]
        %v2549 = vld [vmem:[%s3 + $0x158] sm:$0xff]
        %v2550 = vld [vmem:[%s3 + $0x160] sm:$0xff]
        %v2551 = vld [vmem:[%s3 + $0x168] sm:$0xff]
        %v2552 = vld [vmem:[%s3 + $0x170] sm:$0xff]
        %v2553 = vld [vmem:[%s3 + $0x178] sm:$0xff]
        %v2554 = vld [vmem:[%s3 + $0x180] sm:$0xff]
        %v2555 = vld [vmem:[%s3 + $0x188] sm:$0xff]
        %v2556 = vld [vmem:[%s3 + $0x190] sm:$0xff]
        %v2557 = vld [vmem:[%s3 + $0x198] sm:$0xff]
        %v2558 = vld [vmem:[%s3 + $0x1a0] sm:$0xff]
        %v2559 = vld [vmem:[%s3 + $0x1a8] sm:$0xff]
        %v2560 = vld [vmem:[%s3 + $0x1b0] sm:$0xff]
        %v2561 = vld [vmem:[%s3 + $0x1b8] sm:$0xff]
        %v2562 = vld [vmem:[%s3 + $0x1c0] sm:$0xff]
        %v2563 = vld [vmem:[%s3 + $0x1c8] sm:$0xff]
        %v2564 = vld [vmem:[%s3 + $0x1d0] sm:$0xff]
        %v2565 = vld [vmem:[%s3 + $0x1d8] sm:$0xff]
        %v2566 = vld [vmem:[%s3 + $0x1e0] sm:$0xff]
        %v2567 = vld [vmem:[%s3 + $0x1e8] sm:$0xff]
        %v2568 = vld [vmem:[%s3 + $0x1f0] sm:$0xff]
        %v2569 = vld [vmem:[%s3 + $0x1f8] sm:$0xff]
        %v2570 = vld [vmem:[%s4] sm:$0xf]
        %v2572 = vlaneseq
        %v2573 = vshrl.u32 %v2572, 7
        %v2574 = vsub.s32 0, %v2573
        %v2575 = vrot.slane %v2570, %v2574
        %v2576 = vlaneseq
        %v2577 = vshrl.u32 %v2576, 7
        %v2578 = vsub.s32 1, %v2577
        %v2579 = vrot.slane %v2570, %v2578
        %v2580 = vlaneseq
        %v2581 = vshrl.u32 %v2580, 7
        %v2582 = vsub.s32 2, %v2581
        %v2583 = vrot.slane %v2570, %v2582
        %v2584 = vlaneseq
        %v2585 = vshrl.u32 %v2584, 7
        %v2586 = vsub.s32 3, %v2585
        %v2587 = vrot.slane %v2570, %v2586
        %v2656 = vunpack.c.l.b16 %v2506
        %v2657 = vunpack.c.h.b16 %v2506
        %v2658 = vunpack.c.l.b16 %v2507
        %v2659 = vunpack.c.h.b16 %v2507
        %v2660 = vunpack.c.l.b16 %v2508
        %v2661 = vunpack.c.h.b16 %v2508
        %v2662 = vunpack.c.l.b16 %v2509
        %v2663 = vunpack.c.h.b16 %v2509
        %v2664 = vunpack.c.l.b16 %v2510
        %v2665 = vunpack.c.h.b16 %v2510
        %v2666 = vunpack.c.l.b16 %v2511
        %v2667 = vunpack.c.h.b16 %v2511
        %v2668 = vunpack.c.l.b16 %v2512
        %v2669 = vunpack.c.h.b16 %v2512
        %v2670 = vunpack.c.l.b16 %v2513
        %v2671 = vunpack.c.h.b16 %v2513
        %v2672 = vunpack.c.l.b16 %v2514
        %v2673 = vunpack.c.h.b16 %v2514
        %v2674 = vunpack.c.l.b16 %v2515
        %v2675 = vunpack.c.h.b16 %v2515
        %v2676 = vunpack.c.l.b16 %v2516
        %v2677 = vunpack.c.h.b16 %v2516
        %v2678 = vunpack.c.l.b16 %v2517
        %v2679 = vunpack.c.h.b16 %v2517
        %v2680 = vunpack.c.l.b16 %v2518
        %v2681 = vunpack.c.h.b16 %v2518
        %v2682 = vunpack.c.l.b16 %v2519
        %v2683 = vunpack.c.h.b16 %v2519
        %v2684 = vunpack.c.l.b16 %v2520
        %v2685 = vunpack.c.h.b16 %v2520
        %v2686 = vunpack.c.l.b16 %v2521
        %v2687 = vunpack.c.h.b16 %v2521
        %v2688 = vunpack.c.l.b16 %v2522
        %v2689 = vunpack.c.h.b16 %v2522
        %v2690 = vunpack.c.l.b16 %v2523
        %v2691 = vunpack.c.h.b16 %v2523
        %v2692 = vunpack.c.l.b16 %v2524
        %v2693 = vunpack.c.h.b16 %v2524
        %v2694 = vunpack.c.l.b16 %v2525
        %v2695 = vunpack.c.h.b16 %v2525
        %v2696 = vunpack.c.l.b16 %v2526
        %v2697 = vunpack.c.h.b16 %v2526
        %v2698 = vunpack.c.l.b16 %v2527
        %v2699 = vunpack.c.h.b16 %v2527
        %v2700 = vunpack.c.l.b16 %v2528
        %v2701 = vunpack.c.h.b16 %v2528
        %v2702 = vunpack.c.l.b16 %v2529
        %v2703 = vunpack.c.h.b16 %v2529
        %v2704 = vunpack.c.l.b16 %v2530
        %v2705 = vunpack.c.h.b16 %v2530
        %v2706 = vunpack.c.l.b16 %v2531
        %v2707 = vunpack.c.h.b16 %v2531
        %v2708 = vunpack.c.l.b16 %v2532
        %v2709 = vunpack.c.h.b16 %v2532
        %v2710 = vunpack.c.l.b16 %v2533
        %v2711 = vunpack.c.h.b16 %v2533
        %v2712 = vunpack.c.l.b16 %v2534
        %v2713 = vunpack.c.h.b16 %v2534
        %v2714 = vunpack.c.l.b16 %v2535
        %v2715 = vunpack.c.h.b16 %v2535
        %v2716 = vunpack.c.l.b16 %v2536
        %v2717 = vunpack.c.h.b16 %v2536
        %v2718 = vunpack.c.l.b16 %v2537
        %v2719 = vunpack.c.h.b16 %v2537
        %v2720 = vunpack.c.l.b16 %v2538
        %v2721 = vunpack.c.h.b16 %v2538
        %v2722 = vunpack.c.l.b16 %v2539
        %v2723 = vunpack.c.h.b16 %v2539
        %v2724 = vunpack.c.l.b16 %v2540
        %v2725 = vunpack.c.h.b16 %v2540
        %v2726 = vunpack.c.l.b16 %v2541
        %v2727 = vunpack.c.h.b16 %v2541
        %v2728 = vunpack.c.l.b16 %v2542
        %v2729 = vunpack.c.h.b16 %v2542
        %v2730 = vunpack.c.l.b16 %v2543
        %v2731 = vunpack.c.h.b16 %v2543
        %v2732 = vunpack.c.l.b16 %v2544
        %v2733 = vunpack.c.h.b16 %v2544
        %v2734 = vunpack.c.l.b16 %v2545
        %v2735 = vunpack.c.h.b16 %v2545
        %v2736 = vunpack.c.l.b16 %v2546
        %v2737 = vunpack.c.h.b16 %v2546
        %v2738 = vunpack.c.l.b16 %v2547
        %v2739 = vunpack.c.h.b16 %v2547
        %v2740 = vunpack.c.l.b16 %v2548
        %v2741 = vunpack.c.h.b16 %v2548
        %v2742 = vunpack.c.l.b16 %v2549
        %v2743 = vunpack.c.h.b16 %v2549
        %v2744 = vunpack.c.l.b16 %v2550
        %v2745 = vunpack.c.h.b16 %v2550
        %v2746 = vunpack.c.l.b16 %v2551
        %v2747 = vunpack.c.h.b16 %v2551
        %v2748 = vunpack.c.l.b16 %v2552
        %v2749 = vunpack.c.h.b16 %v2552
        %v2750 = vunpack.c.l.b16 %v2553
        %v2751 = vunpack.c.h.b16 %v2553
        %v2752 = vunpack.c.l.b16 %v2554
        %v2753 = vunpack.c.h.b16 %v2554
        %v2754 = vunpack.c.l.b16 %v2555
        %v2755 = vunpack.c.h.b16 %v2555
        %v2756 = vunpack.c.l.b16 %v2556
        %v2757 = vunpack.c.h.b16 %v2556
        %v2758 = vunpack.c.l.b16 %v2557
        %v2759 = vunpack.c.h.b16 %v2557
        %v2760 = vunpack.c.l.b16 %v2558
        %v2761 = vunpack.c.h.b16 %v2558
        %v2762 = vunpack.c.l.b16 %v2559
        %v2763 = vunpack.c.h.b16 %v2559
        %v2764 = vunpack.c.l.b16 %v2560
        %v2765 = vunpack.c.h.b16 %v2560
        %v2766 = vunpack.c.l.b16 %v2561
        %v2767 = vunpack.c.h.b16 %v2561
        %v2768 = vunpack.c.l.b16 %v2562
        %v2769 = vunpack.c.h.b16 %v2562
        %v2770 = vunpack.c.l.b16 %v2563
        %v2771 = vunpack.c.h.b16 %v2563
        %v2772 = vunpack.c.l.b16 %v2564
        %v2773 = vunpack.c.h.b16 %v2564
        %v2774 = vunpack.c.l.b16 %v2565
        %v2775 = vunpack.c.h.b16 %v2565
        %v2776 = vunpack.c.l.b16 %v2566
        %v2777 = vunpack.c.h.b16 %v2566
        %v2778 = vunpack.c.l.b16 %v2567
        %v2779 = vunpack.c.h.b16 %v2567
        %v2780 = vunpack.c.l.b16 %v2568
        %v2781 = vunpack.c.h.b16 %v2568
        %v2782 = vunpack.c.l.b16 %v2569
        %v2783 = vunpack.c.h.b16 %v2569
        %v2784 = vpack.c.b16 %v2660, %v2656
        %v2785 = vpack.c.b16 %v2661, %v2657
        %v2786 = vpack.c.b16 %v2662, %v2658
        %v2787 = vpack.c.b16 %v2663, %v2659
        %v2788 = vpack.c.b16 %v2668, %v2664
        %v2789 = vpack.c.b16 %v2669, %v2665
        %v2790 = vpack.c.b16 %v2670, %v2666
        %v2791 = vpack.c.b16 %v2671, %v2667
        %v2792 = vpack.c.b16 %v2676, %v2672
        %v2793 = vpack.c.b16 %v2677, %v2673
        %v2794 = vpack.c.b16 %v2678, %v2674
        %v2795 = vpack.c.b16 %v2679, %v2675
        %v2796 = vpack.c.b16 %v2684, %v2680
        %v2797 = vpack.c.b16 %v2685, %v2681
        %v2798 = vpack.c.b16 %v2686, %v2682
        %v2799 = vpack.c.b16 %v2687, %v2683
        %v2800 = vpack.c.b16 %v2692, %v2688
        %v2801 = vpack.c.b16 %v2693, %v2689
        %v2802 = vpack.c.b16 %v2694, %v2690
        %v2803 = vpack.c.b16 %v2695, %v2691
        %v2804 = vpack.c.b16 %v2700, %v2696
        %v2805 = vpack.c.b16 %v2701, %v2697
        %v2806 = vpack.c.b16 %v2702, %v2698
        %v2807 = vpack.c.b16 %v2703, %v2699
        %v2808 = vpack.c.b16 %v2708, %v2704
        %v2809 = vpack.c.b16 %v2709, %v2705
        %v2810 = vpack.c.b16 %v2710, %v2706
        %v2811 = vpack.c.b16 %v2711, %v2707
        %v2812 = vpack.c.b16 %v2716, %v2712
        %v2813 = vpack.c.b16 %v2717, %v2713
        %v2814 = vpack.c.b16 %v2718, %v2714
        %v2815 = vpack.c.b16 %v2719, %v2715
        %v2816 = vpack.c.b16 %v2724, %v2720
        %v2817 = vpack.c.b16 %v2725, %v2721
        %v2818 = vpack.c.b16 %v2726, %v2722
        %v2819 = vpack.c.b16 %v2727, %v2723
        %v2820 = vpack.c.b16 %v2732, %v2728
        %v2821 = vpack.c.b16 %v2733, %v2729
        %v2822 = vpack.c.b16 %v2734, %v2730
        %v2823 = vpack.c.b16 %v2735, %v2731
        %v2824 = vpack.c.b16 %v2740, %v2736
        %v2825 = vpack.c.b16 %v2741, %v2737
        %v2826 = vpack.c.b16 %v2742, %v2738
        %v2827 = vpack.c.b16 %v2743, %v2739
        %v2828 = vpack.c.b16 %v2748, %v2744
        %v2829 = vpack.c.b16 %v2749, %v2745
        %v2830 = vpack.c.b16 %v2750, %v2746
        %v2831 = vpack.c.b16 %v2751, %v2747
        %v2832 = vpack.c.b16 %v2756, %v2752
        %v2833 = vpack.c.b16 %v2757, %v2753
        %v2834 = vpack.c.b16 %v2758, %v2754
        %v2835 = vpack.c.b16 %v2759, %v2755
        %v2836 = vpack.c.b16 %v2764, %v2760
        %v2837 = vpack.c.b16 %v2765, %v2761
        %v2838 = vpack.c.b16 %v2766, %v2762
        %v2839 = vpack.c.b16 %v2767, %v2763
        %v2840 = vpack.c.b16 %v2772, %v2768
        %v2841 = vpack.c.b16 %v2773, %v2769
        %v2842 = vpack.c.b16 %v2774, %v2770
        %v2843 = vpack.c.b16 %v2775, %v2771
        %v2844 = vpack.c.b16 %v2780, %v2776
        %v2845 = vpack.c.b16 %v2781, %v2777
        %v2846 = vpack.c.b16 %v2782, %v2778
        %v2847 = vpack.c.b16 %v2783, %v2779
        %2912 = vmatprep.subr.bf16.mxu0 %v2785
        %2913 = vmatpush1.bf16.msra.mxu0 %v2784
        %2914 = vmatprep.subr.bf16.mxu0 %v2789
        %2915 = vmatpush1.bf16.msra.mxu0 %v2788
        %2916 = vmatprep.subr.bf16.mxu0 %v2793
        %2917 = vmatpush1.bf16.msra.mxu0 %v2792
        %2918 = vmatprep.subr.bf16.mxu0 %v2797
        %2919 = vmatpush1.bf16.msra.mxu0 %v2796
        %2920 = vmatprep.subr.bf16.mxu0 %v2801
        %2921 = vmatpush1.bf16.msra.mxu0 %v2800
        %2922 = vmatprep.subr.bf16.mxu0 %v2805
        %2923 = vmatpush1.bf16.msra.mxu0 %v2804
        %2924 = vmatprep.subr.bf16.mxu0 %v2809
        %2925 = vmatpush1.bf16.msra.mxu0 %v2808
        %2926 = vmatprep.subr.bf16.mxu0 %v2813
        %2927 = vmatpush1.bf16.msra.mxu0 %v2812
        %2928 = vmatprep.subr.bf16.mxu0 %v2817
        %2929 = vmatpush1.bf16.msra.mxu0 %v2816
        %2930 = vmatprep.subr.bf16.mxu0 %v2821
        %2931 = vmatpush1.bf16.msra.mxu0 %v2820
        %2932 = vmatprep.subr.bf16.mxu0 %v2825
        %2933 = vmatpush1.bf16.msra.mxu0 %v2824
        %2934 = vmatprep.subr.bf16.mxu0 %v2829
        %2935 = vmatpush1.bf16.msra.mxu0 %v2828
        %2936 = vmatprep.subr.bf16.mxu0 %v2833
        %2937 = vmatpush1.bf16.msra.mxu0 %v2832
        %2938 = vmatprep.subr.bf16.mxu0 %v2837
        %2939 = vmatpush1.bf16.msra.mxu0 %v2836
        %2940 = vmatprep.subr.bf16.mxu0 %v2841
        %2941 = vmatpush1.bf16.msra.mxu0 %v2840
        %2942 = vmatprep.subr.bf16.mxu0 %v2845
        %2943 = vmatpush1.bf16.msra.mxu0 %v2844
        %2944 = vmatprep.mubr.bf16.mxu0 %v2504
        %2945 = vmatmul.mubr.bf16.gmra.mrb[0].mxu0 %v2495
        %v2946 = vpop.f32.mrb[0].mxu0
        %v2947 = vadd.f32 %v2575, %v2946
        %v2948 = vpop.f32.mrb[0].mxu0
        %v2949 = vadd.f32 %v2579, %v2948
        %v2950 = vpop.f32.mrb[0].mxu0
        %v2951 = vadd.f32 %v2575, %v2950
        %v2952 = vpop.f32.mrb[0].mxu0
        %v2953 = vadd.f32 %v2579, %v2952
        %2954 = vdwg.mxu0
        %2955 = vmatprep.subr.bf16.mxu0 %v2787
        %2956 = vmatpush1.bf16.msra.mxu0 %v2786
        %2957 = vmatprep.subr.bf16.mxu0 %v2791
        %2958 = vmatpush1.bf16.msra.mxu0 %v2790
        %2959 = vmatprep.subr.bf16.mxu0 %v2795
        %2960 = vmatpush1.bf16.msra.mxu0 %v2794
        %2961 = vmatprep.subr.bf16.mxu0 %v2799
        %2962 = vmatpush1.bf16.msra.mxu0 %v2798
        %2963 = vmatprep.subr.bf16.mxu0 %v2803
        %2964 = vmatpush1.bf16.msra.mxu0 %v2802
        %2965 = vmatprep.subr.bf16.mxu0 %v2807
        %2966 = vmatpush1.bf16.msra.mxu0 %v2806
        %2967 = vmatprep.subr.bf16.mxu0 %v2811
        %2968 = vmatpush1.bf16.msra.mxu0 %v2810
        %2969 = vmatprep.subr.bf16.mxu0 %v2815
        %2970 = vmatpush1.bf16.msra.mxu0 %v2814
        %2971 = vmatprep.subr.bf16.mxu0 %v2819
        %2972 = vmatpush1.bf16.msra.mxu0 %v2818
        %2973 = vmatprep.subr.bf16.mxu0 %v2823
        %2974 = vmatpush1.bf16.msra.mxu0 %v2822
        %2975 = vmatprep.subr.bf16.mxu0 %v2827
        %2976 = vmatpush1.bf16.msra.mxu0 %v2826
        %2977 = vmatprep.subr.bf16.mxu0 %v2831
        %2978 = vmatpush1.bf16.msra.mxu0 %v2830
        %2979 = vmatprep.subr.bf16.mxu0 %v2835
        %2980 = vmatpush1.bf16.msra.mxu0 %v2834
        %2981 = vmatprep.subr.bf16.mxu0 %v2839
        %2982 = vmatpush1.bf16.msra.mxu0 %v2838
        %2983 = vmatprep.subr.bf16.mxu0 %v2843
        %2984 = vmatpush1.bf16.msra.mxu0 %v2842
        %2985 = vmatprep.subr.bf16.mxu0 %v2847
        %2986 = vmatpush1.bf16.msra.mxu0 %v2846
        %2987 = vmatprep.mubr.bf16.mxu0 %v2504
        %2988 = vmatmul.mubr.bf16.gmra.mrb[0].mxu0 %v2495
        %v2989 = vpop.f32.mrb[0].mxu0
        %v2990 = vadd.f32 %v2583, %v2989
        %v2991 = vpop.f32.mrb[0].mxu0
        %v2992 = vadd.f32 %v2587, %v2991
        %v2993 = vpop.f32.mrb[0].mxu0
        %v2994 = vadd.f32 %v2583, %v2993
        %v2995 = vpop.f32.mrb[0].mxu0
        %v2996 = vadd.f32 %v2587, %v2995
        %2997 = vdwg.mxu0
        %2998 = vst [vmem:[%s303] sm:$0xff] %v2947
        %2999 = vst [vmem:[%s303 + $0x8] sm:$0xff] %v2949
        %3000 = vst [vmem:[%s303 + $0x10] sm:$0xff] %v2990
        %3001 = vst [vmem:[%s303 + $0x18] sm:$0xff] %v2992
        %3002 = vst [vmem:[%s303 + $0x20] sm:$0xff] %v2951
        %3003 = vst [vmem:[%s303 + $0x28] sm:$0xff] %v2953
        %3004 = vst [vmem:[%s303 + $0x30] sm:$0xff] %v2994
        %3005 = vst [vmem:[%s303 + $0x38] sm:$0xff] %v2996
      $region48: #{vidtext_forward.1} parent=39 // pred_fallthru
        _
      %s3006 = smul.u32 2, %s20
      %p3007 = scmp.lt.s32.totalorder %s3006, 3
      %s3008 = scalar_select %p3007, %s3006, 3
      %s3009 = smul.addr %s3008, 4
      %s3010 = smul.addr %s3009, 8
      %s3011 = scalar_lea.vmem %s5, %s3010
      // Predicated region
      $region49: #{vidtext_forward.1} parent=39 // pred_check
        %p3012 = pneg %p168
      $region50: #{vidtext_forward.1} parent=39 // pred_check_branch
        %3014 = sbr.rel (%p3012) target = $region52
      $region51: #{vidtext_forward.1} parent=39 // pred_region
        %s3015 = smul.u32 2, %s20
      $region52: #{vidtext_forward.1} parent=39 // pred_fallthru
        _
    $region40: #{vidtext_forward.1} parent=5 // pred_fallthru
      _
    %p3016 = scmp.le.s32.totalorder 2, %s11
    // Predicated region
    $region53: #{vidtext_forward.1} parent=5 // pred_check
      %p3017 = pneg %p3016
    $region54: #{vidtext_forward.1} parent=5 // pred_check_branch
      %3019 = sbr.rel (%p3017) target = $region56
    $region55: #{vidtext_forward.1} parent=5 // pred_region
      %s3020 = ssub.s32 %s11, 2
      // Predicated region
      $region57: #{vidtext_forward.1} parent=55 // pred_check
        %p3021 = pneg %p174
      $region58: #{vidtext_forward.1} parent=55 // pred_check_branch
        %3023 = sbr.rel (%p3021) target = $region60
      $region59: #{vidtext_forward.1} parent=55 // pred_region
        %s3024 = smul.u32 2, %s22
        %p3025 = scmp.lt.s32.totalorder %s3024, 3
        %s3026 = scalar_select %p3025, %s3024, 3
        %s3027 = smul.addr %s3026, 4
        %s3028 = smul.addr %s3027, 8
        %s3029 = scalar_lea.vmem %s5, %s3028
      $region60: #{vidtext_forward.1} parent=55 // pred_fallthru
        _
    $region56: #{vidtext_forward.1} parent=5 // pred_fallthru
      _
  $region6: #{vidtext_forward.1} parent=0 // loop_footer
    %s15 = sadd.s32 1, %s11
  $region7: #{vidtext_forward.1} parent=0 // loop_footer_branch
    %10 = sbr.rel target = $region3
  $region8: #{vidtext_forward.1} parent=0 // loop_exit
    _

</llo_original>
